<compile_context>
chip_gen: v6e
topology: v6e:2x2x1
jax: 0.10.0
libtpu: 0.0.40
codegen_flags: <defaults>
</compile_context>

<pallas_src>
import functools

import jax
import jax.numpy as jnp
from jax.experimental import pallas as pl
from jax.experimental.pallas import tpu as pltpu


# ----------------------------------------------------------------------------
# Fused multi-layer MLP kernel (all layers in one pallas_call)
# ----------------------------------------------------------------------------
def _fused_mlp_kernel(*refs, acts, compute_dtype):
    # refs = [x, w0, b0, w1, b1, ..., out]; intermediates stay in VMEM/vregs.
    x_ref, out_ref = refs[0], refs[-1]
    h = x_ref[...]
    for i, act in enumerate(acts):
        w = refs[1 + 2 * i][...]
        b = refs[2 + 2 * i][...]
        h = jnp.dot(h.astype(compute_dtype), w.astype(compute_dtype),
                    preferred_element_type=jnp.float32) + b
        if act == "relu":
            h = jnp.maximum(h, 0.0)
    out_ref[...] = h


def fused_mlp(x, layers, acts=None, compute_dtype=jnp.bfloat16, tm_max=256):
    """y = MLP(x) in a single pallas_call.

    x: (M, K0) f32.  layers: list of {"w": (K_i, N_i), "b": (N_i,)}.
    acts: per-layer activation ('relu' or None); default relu on all but last.
    """
    x = x.astype(jnp.float32)
    M, Kin = x.shape
    n_layers = len(layers)
    if acts is None:
        acts = ("relu",) * (n_layers - 1) + (None,)
    acts = tuple(acts)

    TM = M if M <= tm_max else tm_max          # single block at small M
    args = [x]
    in_specs = [pl.BlockSpec((TM, Kin), lambda i: (i, 0))]
    for p in layers:
        w = p["w"].astype(jnp.float32)
        b = p["b"].astype(jnp.float32).reshape(1, -1)
        args += [w, b]
        # Constant index_map -> weights/biases are fetched once and stay
        # resident in VMEM across all row blocks.
        in_specs += [pl.BlockSpec(w.shape, lambda i: (0, 0)),
                     pl.BlockSpec(b.shape, lambda i: (0, 0))]
    N = layers[-1]["w"].shape[1]

    return pl.pallas_call(
        functools.partial(_fused_mlp_kernel, acts=acts,
                          compute_dtype=compute_dtype),
        out_shape=jax.ShapeDtypeStruct((M, N), jnp.float32),
        grid=(pl.cdiv(M, TM),),
        in_specs=in_specs,
        out_specs=pl.BlockSpec((TM, N), lambda i: (i, 0)),
        compiler_params=pltpu.CompilerParams(
            dimension_semantics=("parallel",)),
    )(*args)


# ----------------------------------------------------------------------------
# Fused transformer-encoder-layer kernel (attention + FFN + layernorms)
# ----------------------------------------------------------------------------
def _layer_norm(x, w, b, eps=1e-5):
    mu = jnp.mean(x, axis=-1, keepdims=True)
    var = jnp.mean((x - mu) ** 2, axis=-1, keepdims=True)
    return (x - mu) * jax.lax.rsqrt(var + eps) * w + b


def _transformer_layer_kernel(src_ref, wqkv_ref, bqkv_ref, wo_ref, bo_ref,
                              w1_ref, b1_ref, w2_ref, b2_ref,
                              ln1w_ref, ln1b_ref, ln2w_ref, ln2b_ref,
                              out_ref, *, nb, num_heads, head_dim,
                              compute_dtype):
    cd = compute_dtype
    src = src_ref[...]                                   # (S*Nb, E) f32
    R, E = src.shape

    qkv = jnp.dot(src.astype(cd), wqkv_ref[...].astype(cd),
                  preferred_element_type=jnp.float32) + bqkv_ref[...]
    q, k, v = qkv[:, :E], qkv[:, E:2 * E], qkv[:, 2 * E:]

    # Attention over the batch axis (PyTorch batch_first=False: seq == batch
    # of the embedding tensor).  Rows r = s*Nb + n attend each other iff they
    # share the chunk index n.  Using a masked (R, R) score matrix keeps the
    # whole attention in plain 2-D matmuls (no transposes / head reshapes).
    ri = jax.lax.broadcasted_iota(jnp.int32, (R, R), 0)
    ci = jax.lax.broadcasted_iota(jnp.int32, (R, R), 1)
    same_chunk = (ri % nb) == (ci % nb)

    scale = 1.0 / float(head_dim) ** 0.5
    ctx = []
    for h in range(num_heads):                           # tiny, unrolled
        sl = slice(h * head_dim, (h + 1) * head_dim)
        qh = (q[:, sl] * scale).astype(cd)
        kh = k[:, sl].astype(cd)
        vh = v[:, sl].astype(cd)
        s = jax.lax.dot_general(qh, kh, (((1,), (1,)), ((), ())),
                                preferred_element_type=jnp.float32)
        s = jnp.where(same_chunk, s, -1e30)
        m = jnp.max(s, axis=-1, keepdims=True)
        e = jnp.exp(s - m)
        p = e * pl.reciprocal(jnp.sum(e, axis=-1, keepdims=True), approx=True)
        ctx.append(jnp.dot(p.astype(cd), vh,
                           preferred_element_type=jnp.float32))
    ctx = jnp.concatenate(ctx, axis=-1)

    attn_out = jnp.dot(ctx.astype(cd), wo_ref[...].astype(cd),
                       preferred_element_type=jnp.float32) + bo_ref[...]
    x1 = _layer_norm(src + attn_out, ln1w_ref[...], ln1b_ref[...])

    hmid = jnp.maximum(
        jnp.dot(x1.astype(cd), w1_ref[...].astype(cd),
                preferred_element_type=jnp.float32) + b1_ref[...], 0.0)
    ffn = jnp.dot(hmid.astype(cd), w2_ref[...].astype(cd),
                  preferred_element_type=jnp.float32) + b2_ref[...]
    out_ref[...] = _layer_norm(x1 + ffn, ln2w_ref[...], ln2b_ref[...])


def fused_transformer_layer(p, src, num_heads, compute_dtype=jnp.bfloat16):
    S, Nb, E = src.shape
    head_dim = E // num_heads

    def as2d(a):
        a = jnp.asarray(a, jnp.float32)
        return a.reshape(1, -1) if a.ndim == 1 else a

    args = [src.reshape(S * Nb, E).astype(jnp.float32),
            as2d(p["in_proj"]["w"]), as2d(p["in_proj"]["b"]),
            as2d(p["out_proj"]["w"]), as2d(p["out_proj"]["b"]),
            as2d(p["lin1"]["w"]), as2d(p["lin1"]["b"]),
            as2d(p["lin2"]["w"]), as2d(p["lin2"]["b"]),
            as2d(p["ln1_w"]), as2d(p["ln1_b"]),
            as2d(p["ln2_w"]), as2d(p["ln2_b"])]
    in_specs = [pl.BlockSpec(a.shape, lambda i: (0, 0)) for a in args]

    out = pl.pallas_call(
        functools.partial(_transformer_layer_kernel, nb=Nb,
                          num_heads=num_heads, head_dim=head_dim,
                          compute_dtype=compute_dtype),
        out_shape=jax.ShapeDtypeStruct((S * Nb, E), jnp.float32),
        grid=(1,),
        in_specs=in_specs,
        out_specs=pl.BlockSpec((S * Nb, E), lambda i: (0, 0)),
        compiler_params=pltpu.CompilerParams(
            dimension_semantics=("arbitrary",)),
    )(*args)
    return out.reshape(S, Nb, E)


# ----------------------------------------------------------------------------
# Parameter initialization (deterministic, synthetic)
# ----------------------------------------------------------------------------
def init_linear(key, fan_in, fan_out):
    kw, kb = jax.random.split(key)
    w = jax.random.normal(kw, (fan_in, fan_out), jnp.float32) / jnp.sqrt(
        jnp.float32(fan_in))
    b = 0.01 * jax.random.normal(kb, (fan_out,), jnp.float32)
    return {"w": w, "b": b}


def init_mlp(key, widths):
    keys = jax.random.split(key, len(widths) - 1)
    return [init_linear(k, widths[i], widths[i + 1]) for i, k in enumerate(keys)]


def init_transformer_layer(key, E, ff):
    ks = jax.random.split(key, 4)
    return {
        "in_proj": init_linear(ks[0], E, 3 * E),
        "out_proj": init_linear(ks[1], E, E),
        "lin1": init_linear(ks[2], E, ff),
        "lin2": init_linear(ks[3], ff, E),
        "ln1_w": jnp.ones((E,), jnp.float32), "ln1_b": jnp.zeros((E,), jnp.float32),
        "ln2_w": jnp.ones((E,), jnp.float32), "ln2_b": jnp.zeros((E,), jnp.float32),
    }


# ----------------------------------------------------------------------------
# Model glue (tiny VPU-scale ops stay in plain JAX, vectorized over F / pairs)
# ----------------------------------------------------------------------------
def make_chunks(x, D):
    """x: (B, F, T) -> inps (B, L, F, D), X (B, L, F*D); matches x.unfold."""
    B, F, T = x.shape
    L = T // D
    inps = x[:, :, :L * D].reshape(B, F, L, D).transpose(0, 2, 1, 3)
    return inps, inps.reshape(B, L, F * D)


def embedding_nonlinearity(V, cfg):
    """V: (B, L, latent_dim, F) -> embedding (B, L, latent_dim - 2*num_sins, F)."""
    npoly, ne, ns = cfg["num_poly"], cfg["num_exp"], cfg["num_sins"]
    parts = []
    for i in range(npoly):
        parts.append(V[:, :, i:i + 1, :] ** (i + 1))
    if ne:
        parts.append(jnp.exp(V[:, :, npoly:npoly + ne, :]))
    if ns:
        base = npoly + ne
        parts.append(V[:, :, base + 2 * ns:base + 3 * ns, :] *
                     jnp.cos(V[:, :, base:base + ns, :]))
        parts.append(V[:, :, base + 3 * ns:base + 4 * ns, :] *
                     jnp.sin(V[:, :, base + ns:base + 2 * ns, :]))
    parts.append(V[:, :, npoly + ne + 4 * ns:, :])
    return jnp.concatenate(parts, axis=2)


def varying_multiply(y, U, omegas, delta_t, num_real, num_complex_pairs, k=1):
    """Matches the PyTorch reference (incl. its [complex..., real...] order)."""
    # y: (B, L, m); U: (B, m, nr + 2*ncp); omegas: (B, L, nr + 2*ncp)
    y_p = jnp.einsum("blm,bmj->blj", y, U)          # U^T y per (b, l)
    parts = []
    if num_complex_pairs:
        sl = slice(num_real, num_real + 2 * num_complex_pairs)
        om_c = omegas[:, :, sl].reshape(
            omegas.shape[0], omegas.shape[1], num_complex_pairs, 2)
        yc = y_p[:, :, sl].reshape(
            y_p.shape[0], y_p.shape[1], num_complex_pairs, 2)
        scale = jnp.exp(om_c[..., 1] * delta_t * k)
        c = scale * jnp.cos(om_c[..., 0] * delta_t * k)
        s = scale * jnp.sin(om_c[..., 0] * delta_t * k)
        y0, y1 = yc[..., 0], yc[..., 1]
        cplx = jnp.stack([c * y0 - s * y1, s * y0 + c * y1], axis=-1)
        parts.append(cplx.reshape(cplx.shape[0], cplx.shape[1], -1))
    if num_real:
        parts.append(y_p[:, :, :num_real] *
                     jnp.exp(omegas[:, :, :num_real] * delta_t * k))
    y_next = jnp.concatenate(parts, axis=-1) if len(parts) > 1 else parts[0]
    return jnp.einsum("bij,blj->bli", U, y_next)


def knf_forward(params, cfg, x, max_k=1):
    D, F = cfg["input_dim"], cfg["num_feats"]
    uw, K = cfg["u_window_size"], cfg["latent_dim"]
    nr, ncp = cfg["n_real"], cfg["n_complex_pairs"]
    B = x.shape[0]

    x_cur, x_fut = x[:, :, :uw], x[:, :, uw:]
    inps_c, X_cur = make_chunks(x_cur, D)
    inps_f, X_fut = make_chunks(x_fut, D)
    Lc, Lf = X_cur.shape[1], X_fut.shape[1]
    rc, rf = B * Lc, B * Lf

    # --- encoder: ONE fused call for both halves ---
    X_all = jnp.concatenate([X_cur.reshape(rc, -1), X_fut.reshape(rf, -1)], 0)
    coefs_all = fused_mlp(X_all, params["encoder"])
    coefs_c = coefs_all[:rc].reshape(B, Lc, K, F, D)
    coefs_f = coefs_all[rc:].reshape(B, Lf, K, F, D)
    V_cur = jnp.einsum("blkfd,blfd->blkf", coefs_c, inps_c)
    V_fut = jnp.einsum("blkfd,blfd->blkf", coefs_f, inps_f)
    emb_cur = embedding_nonlinearity(V_cur, cfg)
    emb_fut = embedding_nonlinearity(V_fut, cfg)

    ec = emb_cur.reshape(B, Lc, -1)
    ef = emb_fut.reshape(B, Lf, -1)
    E = ec.shape[-1]

    # --- omega-net: ONE fused call for both halves ---
    om_all = fused_mlp(
        jnp.concatenate([ec.reshape(rc, E), ef.reshape(rf, E)], 0),
        params["omegas"])
    omega_cur = om_all[:rc].reshape(B, Lc, -1)
    omega_fut = om_all[rc:].reshape(B, Lf, -1)

    # --- transformer (one fused kernel per layer) + U projection ---
    z = ec
    for lp in params["transformer"]:
        z = fused_transformer_layer(lp, z, cfg["num_heads"])
    z_t = jnp.swapaxes(z, 1, 2)                          # (B, E, Lc)
    dmd = fused_mlp(z_t.reshape(B * E, Lc), [params["U"]], acts=(None,))
    dmd = dmd.reshape(B, E, nr + ncp)
    dmd = dmd / jnp.sqrt(jnp.sum(dmd ** 2, axis=1, keepdims=True))
    dmd_modes = jnp.concatenate(
        [dmd[:, :, :nr], dmd[:, :, nr:], dmd[:, :, nr:]], axis=-1)

    # --- Koopman advance (plain JAX, tiny) + ONE batched decoder call ---
    latent_pred_list_cur, latent_pred_list_future = [], []
    dec_rows = []
    for k in range(1, max_k + 1):
        pred_cur = varying_multiply(ec, dmd_modes, omega_cur, 1.0, nr, ncp, k)
        pred_fut = varying_multiply(ef, dmd_modes, omega_fut, 1.0, nr, ncp, k)
        latent_pred_list_cur.append(pred_cur)
        latent_pred_list_future.append(pred_fut)
        dec_rows += [pred_cur.reshape(rc, E), pred_fut.reshape(rf, E)]
    dec_rows += [ec.reshape(rc, E), ef.reshape(rf, E)]
    dec_all = fused_mlp(jnp.concatenate(dec_rows, axis=0), params["decoder"])

    pred_list_cur, pred_list_next = [], []
    off = 0
    for _ in range(max_k):
        dc = dec_all[off:off + rc].reshape(B, Lc, -1, F).reshape(B, -1, F)
        off += rc
        df = dec_all[off:off + rf].reshape(B, Lf, -1, F).reshape(B, -1, F)
        off += rf
        pred_list_cur.append(dc)
        pred_list_next.append(df)
    X_recon_cur = dec_all[off:off + rc].reshape(B, Lc, -1); off += rc
    X_recon_fut = dec_all[off:off + rf].reshape(B, Lf, -1)

    return (V_cur, V_fut, X_cur, X_fut, X_recon_cur, X_recon_fut,
            emb_cur, emb_fut, dmd_modes, omega_cur, omega_fut,
            pred_list_cur, pred_list_next,
            latent_pred_list_cur, latent_pred_list_future)


# ----------------------------------------------------------------------------
# Main
# ----------------------------------------------------------------------------
if __name__ == "__main__":
    cfg = dict(
        input_dim=4,
        input_length=32,
        u_window_size=16,
        encoder_hidden_dim=32,
        decoder_hidden_dim=32,
        encoder_num_layers=2,
        decoder_num_layers=2,
        n_real=3,
        n_complex_pairs=2,
        transformer_dim=32,
        transformer_num_layers=1,
        num_heads=2,
        latent_dim=8,
        num_sins=1,
        num_poly=2,
        num_exp=1,
        num_feats=1,
    )
    D, F, K = cfg["input_dim"], cfg["num_feats"], cfg["latent_dim"]
    emb_dim = (K - 2 * cfg["num_sins"]) * F
    enc_widths = [D * F] + [cfg["encoder_hidden_dim"]] * cfg["encoder_num_layers"] \
                 + [K * D * F]
    dec_widths = [emb_dim] + [cfg["decoder_hidden_dim"]] * cfg["decoder_num_layers"] \
                 + [D * F]
    om_widths = [emb_dim, 256, 256, 256,
                 cfg["n_real"] + 2 * cfg["n_complex_pairs"]]

    key = jax.random.PRNGKey(0)
    k_enc, k_dec, k_om, k_u, k_tr, k_x = jax.random.split(key, 6)
    params = {
        # TODO(synk): the reference MLP's 'instance' norm is not defined in the
        # provided source; Linear+ReLU stacks (no norm, no dropout) are used.
        "encoder": init_mlp(k_enc, enc_widths),
        "decoder": init_mlp(k_dec, dec_widths),
        "omegas": init_mlp(k_om, om_widths),
        "U": init_linear(k_u, cfg["u_window_size"] // D,
                         cfg["n_real"] + cfg["n_complex_pairs"]),
        "transformer": [
            init_transformer_layer(k, emb_dim, cfg["transformer_dim"])
            for k in jax.random.split(k_tr, cfg["transformer_num_layers"])
        ],
    }
    # TODO(synk): nn.BatchNorm1d in __init__ is never used in forward -> omitted.

    batch, ts = 2, 32  # ts = u_window_size (16) + future window (16)
    x = jax.random.normal(k_x, (batch, F, ts), jnp.float32)

    fwd = jax.jit(lambda xx: knf_forward(params, cfg, xx, max_k=1))
    outs = fwd(x)
    jax.block_until_ready(outs)
    print("KERNEL_OK")
</pallas_src>

<mosaic_0001>
module attributes {stable_mosaic.version = 11 : i64} {
  func.func @_fused_mlp_kernel(%arg0: i32, %arg1: memref<16x4xf32, #tpu.memory_space<vmem>>, %arg2: memref<4x32xf32, #tpu.memory_space<vmem>>, %arg3: memref<1x32xf32, #tpu.memory_space<vmem>>, %arg4: memref<32x32xf32, #tpu.memory_space<vmem>>, %arg5: memref<1x32xf32, #tpu.memory_space<vmem>>, %arg6: memref<32x32xf32, #tpu.memory_space<vmem>>, %arg7: memref<1x32xf32, #tpu.memory_space<vmem>>, %arg8: memref<16x32xf32, #tpu.memory_space<vmem>>) attributes {dimension_semantics = [#tpu.dimension_semantics<parallel>], iteration_bounds = array<i64: 1>, scalar_prefetch = 0 : i64, scratch_operands = 0 : i64, tpu.core_type = #tpu.core_type<tc>, window_params = [{transform_indices = @transform_0, window_bounds = array<i64: 16, 4>}, {pipeline_mode = #tpu.pipeline_mode<synchronous>, transform_indices = @transform_1, window_bounds = array<i64: 4, 32>}, {pipeline_mode = #tpu.pipeline_mode<synchronous>, transform_indices = @transform_2, window_bounds = array<i64: 1, 32>}, {pipeline_mode = #tpu.pipeline_mode<synchronous>, transform_indices = @transform_3, window_bounds = array<i64: 32, 32>}, {pipeline_mode = #tpu.pipeline_mode<synchronous>, transform_indices = @transform_4, window_bounds = array<i64: 1, 32>}, {pipeline_mode = #tpu.pipeline_mode<synchronous>, transform_indices = @transform_5, window_bounds = array<i64: 32, 32>}, {pipeline_mode = #tpu.pipeline_mode<synchronous>, transform_indices = @transform_6, window_bounds = array<i64: 1, 32>}, {transform_indices = @transform_7, window_bounds = array<i64: 16, 32>}]} {
    %c0 = arith.constant 0 : index
    %c0_0 = arith.constant 0 : index
    %0 = vector.load %arg1[%c0, %c0_0] : memref<16x4xf32, #tpu.memory_space<vmem>>, vector<16x4xf32>
    %c0_1 = arith.constant 0 : index
    %c0_2 = arith.constant 0 : index
    %1 = vector.load %arg2[%c0_1, %c0_2] : memref<4x32xf32, #tpu.memory_space<vmem>>, vector<4x32xf32>
    %c0_3 = arith.constant 0 : index
    %c0_4 = arith.constant 0 : index
    %2 = vector.load %arg3[%c0_3, %c0_4] : memref<1x32xf32, #tpu.memory_space<vmem>>, vector<1x32xf32>
    %3 = arith.truncf %0 : vector<16x4xf32> to vector<16x4xbf16>
    %4 = arith.truncf %1 : vector<4x32xf32> to vector<4x32xbf16>
    %cst = arith.constant dense<0.000000e+00> : vector<16x32xf32>
    %5 = tpu.matmul %3, %4, %cst {dimension_numbers = #tpu.dot_dimension_numbers<[1], [0], [0], [1], [0, 0, 1, 1], [], []>} : vector<16x4xbf16>, vector<4x32xbf16>, vector<16x32xf32> -> vector<16x32xf32>
    %6 = vector.broadcast %2 : vector<1x32xf32> to vector<16x32xf32>
    %7 = arith.addf %5, %6 : vector<16x32xf32>
    %cst_5 = arith.constant 0.000000e+00 : f32
    %8 = vector.broadcast %cst_5 : f32 to vector<16x32xf32>
    %9 = arith.maximumf %7, %8 : vector<16x32xf32>
    %c0_6 = arith.constant 0 : index
    %c0_7 = arith.constant 0 : index
    %10 = vector.load %arg4[%c0_6, %c0_7] : memref<32x32xf32, #tpu.memory_space<vmem>>, vector<32x32xf32>
    %c0_8 = arith.constant 0 : index
    %c0_9 = arith.constant 0 : index
    %11 = vector.load %arg5[%c0_8, %c0_9] : memref<1x32xf32, #tpu.memory_space<vmem>>, vector<1x32xf32>
    %12 = arith.truncf %9 : vector<16x32xf32> to vector<16x32xbf16>
    %13 = arith.truncf %10 : vector<32x32xf32> to vector<32x32xbf16>
    %cst_10 = arith.constant dense<0.000000e+00> : vector<16x32xf32>
    %14 = tpu.matmul %12, %13, %cst_10 {dimension_numbers = #tpu.dot_dimension_numbers<[1], [0], [0], [1], [0, 0, 1, 1], [], []>} : vector<16x32xbf16>, vector<32x32xbf16>, vector<16x32xf32> -> vector<16x32xf32>
    %15 = vector.broadcast %11 : vector<1x32xf32> to vector<16x32xf32>
    %16 = arith.addf %14, %15 : vector<16x32xf32>
    %cst_11 = arith.constant 0.000000e+00 : f32
    %17 = vector.broadcast %cst_11 : f32 to vector<16x32xf32>
    %18 = arith.maximumf %16, %17 : vector<16x32xf32>
    %c0_12 = arith.constant 0 : index
    %c0_13 = arith.constant 0 : index
    %19 = vector.load %arg6[%c0_12, %c0_13] : memref<32x32xf32, #tpu.memory_space<vmem>>, vector<32x32xf32>
    %c0_14 = arith.constant 0 : index
    %c0_15 = arith.constant 0 : index
    %20 = vector.load %arg7[%c0_14, %c0_15] : memref<1x32xf32, #tpu.memory_space<vmem>>, vector<1x32xf32>
    %21 = arith.truncf %18 : vector<16x32xf32> to vector<16x32xbf16>
    %22 = arith.truncf %19 : vector<32x32xf32> to vector<32x32xbf16>
    %cst_16 = arith.constant dense<0.000000e+00> : vector<16x32xf32>
    %23 = tpu.matmul %21, %22, %cst_16 {dimension_numbers = #tpu.dot_dimension_numbers<[1], [0], [0], [1], [0, 0, 1, 1], [], []>} : vector<16x32xbf16>, vector<32x32xbf16>, vector<16x32xf32> -> vector<16x32xf32>
    %24 = vector.broadcast %20 : vector<1x32xf32> to vector<16x32xf32>
    %25 = arith.addf %23, %24 : vector<16x32xf32>
    %c0_17 = arith.constant 0 : index
    %c0_18 = arith.constant 0 : index
    %26 = vector.load %arg8[%c0_17, %c0_18] : memref<16x32xf32, #tpu.memory_space<vmem>>, vector<16x32xf32>
    tpu.vector_store %arg8[%c0_17, %c0_18], %25 {strides = array<i32>} : memref<16x32xf32, #tpu.memory_space<vmem>>, vector<16x32xf32>,
    return
  }
  func.func @transform_0(%arg0: i32) -> (i32, i32) {
    %c0_i32 = arith.constant 0 : i32
    %c0_i32_0 = arith.constant 0 : i32
    return %arg0, %c0_i32 : i32, i32
  }
  func.func @transform_1(%arg0: i32) -> (i32, i32) {
    %c0_i32 = arith.constant 0 : i32
    %c0_i32_0 = arith.constant 0 : i32
    %c0_i32_1 = arith.constant 0 : i32
    return %c0_i32, %c0_i32_0 : i32, i32
  }
  func.func @transform_2(%arg0: i32) -> (i32, i32) {
    %c0_i32 = arith.constant 0 : i32
    %c0_i32_0 = arith.constant 0 : i32
    %c0_i32_1 = arith.constant 0 : i32
    return %c0_i32, %c0_i32_0 : i32, i32
  }
  func.func @transform_3(%arg0: i32) -> (i32, i32) {
    %c0_i32 = arith.constant 0 : i32
    %c0_i32_0 = arith.constant 0 : i32
    %c0_i32_1 = arith.constant 0 : i32
    return %c0_i32, %c0_i32_0 : i32, i32
  }
  func.func @transform_4(%arg0: i32) -> (i32, i32) {
    %c0_i32 = arith.constant 0 : i32
    %c0_i32_0 = arith.constant 0 : i32
    %c0_i32_1 = arith.constant 0 : i32
    return %c0_i32, %c0_i32_0 : i32, i32
  }
  func.func @transform_5(%arg0: i32) -> (i32, i32) {
    %c0_i32 = arith.constant 0 : i32
    %c0_i32_0 = arith.constant 0 : i32
    %c0_i32_1 = arith.constant 0 : i32
    return %c0_i32, %c0_i32_0 : i32, i32
  }
  func.func @transform_6(%arg0: i32) -> (i32, i32) {
    %c0_i32 = arith.constant 0 : i32
    %c0_i32_0 = arith.constant 0 : i32
    %c0_i32_1 = arith.constant 0 : i32
    return %c0_i32, %c0_i32_0 : i32, i32
  }
  func.func @transform_7(%arg0: i32) -> (i32, i32) {
    %c0_i32 = arith.constant 0 : i32
    %c0_i32_0 = arith.constant 0 : i32
    return %arg0, %c0_i32 : i32, i32
  }
}

module attributes {stable_mosaic.version = 11 : i64} {
  func.func @_transformer_layer_kernel(%arg0: i32, %arg1: memref<8x6xf32, #tpu.memory_space<vmem>>, %arg2: memref<6x18xf32, #tpu.memory_space<vmem>>, %arg3: memref<1x18xf32, #tpu.memory_space<vmem>>, %arg4: memref<6x6xf32, #tpu.memory_space<vmem>>, %arg5: memref<1x6xf32, #tpu.memory_space<vmem>>, %arg6: memref<6x32xf32, #tpu.memory_space<vmem>>, %arg7: memref<1x32xf32, #tpu.memory_space<vmem>>, %arg8: memref<32x6xf32, #tpu.memory_space<vmem>>, %arg9: memref<1x6xf32, #tpu.memory_space<vmem>>, %arg10: memref<1x6xf32, #tpu.memory_space<vmem>>, %arg11: memref<1x6xf32, #tpu.memory_space<vmem>>, %arg12: memref<1x6xf32, #tpu.memory_space<vmem>>, %arg13: memref<1x6xf32, #tpu.memory_space<vmem>>, %arg14: memref<8x6xf32, #tpu.memory_space<vmem>>) attributes {dimension_semantics = [#tpu.dimension_semantics<arbitrary>], iteration_bounds = array<i64: 1>, scalar_prefetch = 0 : i64, scratch_operands = 0 : i64, tpu.core_type = #tpu.core_type<tc>, window_params = [{pipeline_mode = #tpu.pipeline_mode<synchronous>, transform_indices = @transform_0, window_bounds = array<i64: 8, 6>}, {pipeline_mode = #tpu.pipeline_mode<synchronous>, transform_indices = @transform_1, window_bounds = array<i64: 6, 18>}, {pipeline_mode = #tpu.pipeline_mode<synchronous>, transform_indices = @transform_2, window_bounds = array<i64: 1, 18>}, {pipeline_mode = #tpu.pipeline_mode<synchronous>, transform_indices = @transform_3, window_bounds = array<i64: 6, 6>}, {pipeline_mode = #tpu.pipeline_mode<synchronous>, transform_indices = @transform_4, window_bounds = array<i64: 1, 6>}, {pipeline_mode = #tpu.pipeline_mode<synchronous>, transform_indices = @transform_5, window_bounds = array<i64: 6, 32>}, {pipeline_mode = #tpu.pipeline_mode<synchronous>, transform_indices = @transform_6, window_bounds = array<i64: 1, 32>}, {pipeline_mode = #tpu.pipeline_mode<synchronous>, transform_indices = @transform_7, window_bounds = array<i64: 32, 6>}, {pipeline_mode = #tpu.pipeline_mode<synchronous>, transform_indices = @transform_8, window_bounds = array<i64: 1, 6>}, {pipeline_mode = #tpu.pipeline_mode<synchronous>, transform_indices = @transform_9, window_bounds = array<i64: 1, 6>}, {pipeline_mode = #tpu.pipeline_mode<synchronous>, transform_indices = @transform_10, window_bounds = array<i64: 1, 6>}, {pipeline_mode = #tpu.pipeline_mode<synchronous>, transform_indices = @transform_11, window_bounds = array<i64: 1, 6>}, {pipeline_mode = #tpu.pipeline_mode<synchronous>, transform_indices = @transform_12, window_bounds = array<i64: 1, 6>}, {pipeline_mode = #tpu.pipeline_mode<synchronous>, transform_indices = @transform_13, window_bounds = array<i64: 8, 6>}]} {
    %c0 = arith.constant 0 : index
    %c0_0 = arith.constant 0 : index
    %0 = vector.load %arg1[%c0, %c0_0] : memref<8x6xf32, #tpu.memory_space<vmem>>, vector<8x6xf32>
    %1 = arith.truncf %0 : vector<8x6xf32> to vector<8x6xbf16>
    %c0_1 = arith.constant 0 : index
    %c0_2 = arith.constant 0 : index
    %2 = vector.load %arg2[%c0_1, %c0_2] : memref<6x18xf32, #tpu.memory_space<vmem>>, vector<6x18xf32>
    %3 = arith.truncf %2 : vector<6x18xf32> to vector<6x18xbf16>
    %cst = arith.constant dense<0.000000e+00> : vector<8x18xf32>
    %4 = tpu.matmul %1, %3, %cst {dimension_numbers = #tpu.dot_dimension_numbers<[1], [0], [0], [1], [0, 0, 1, 1], [], []>} : vector<8x6xbf16>, vector<6x18xbf16>, vector<8x18xf32> -> vector<8x18xf32>
    %c0_3 = arith.constant 0 : index
    %c0_4 = arith.constant 0 : index
    %5 = vector.load %arg3[%c0_3, %c0_4] : memref<1x18xf32, #tpu.memory_space<vmem>>, vector<1x18xf32>
    %6 = vector.broadcast %5 : vector<1x18xf32> to vector<8x18xf32>
    %7 = arith.addf %4, %6 : vector<8x18xf32>
    %8 = vector.extract_strided_slice %7 {offsets = [0, 0], sizes = [8, 6], strides = [1, 1]} : vector<8x18xf32> to vector<8x6xf32>
    %9 = vector.extract_strided_slice %7 {offsets = [0, 6], sizes = [8, 6], strides = [1, 1]} : vector<8x18xf32> to vector<8x6xf32>
    %10 = vector.extract_strided_slice %7 {offsets = [0, 12], sizes = [8, 6], strides = [1, 1]} : vector<8x18xf32> to vector<8x6xf32>
    %11 = tpu.iota {dimensions = array<i32: 0>} : vector<8x8xi32>
    %12 = tpu.iota {dimensions = array<i32: 1>} : vector<8x8xi32>
    %c4_i32 = arith.constant 4 : i32
    %c0_i32 = arith.constant 0 : i32
    %13 = arith.cmpi eq, %c4_i32, %c0_i32 : i32
    %c1_i32 = arith.constant 1 : i32
    %14 = arith.select %13, %c1_i32, %c4_i32 : i32
    %15 = vector.broadcast %14 : i32 to vector<8x8xi32>
    %16 = arith.remsi %11, %15 : vector<8x8xi32>
    %c0_i32_5 = arith.constant 0 : i32
    %17 = vector.broadcast %c0_i32_5 : i32 to vector<8x8xi32>
    %18 = arith.cmpi ne, %16, %17 : vector<8x8xi32>
    %c0_i32_6 = arith.constant 0 : i32
    %19 = vector.broadcast %c0_i32_6 : i32 to vector<8x8xi32>
    %20 = arith.cmpi slt, %16, %19 : vector<8x8xi32>
    %c0_i32_7 = arith.constant 0 : i32
    %21 = arith.cmpi slt, %14, %c0_i32_7 : i32
    %22 = vector.broadcast %21 : i1 to vector<8x8xi1>
    %23 = vector.broadcast %22 : vector<8x8xi1> to vector<8x8xi1>
    %24 = arith.xori %20, %23 : vector<8x8xi1>
    %25 = arith.andi %24, %18 : vector<8x8xi1>
    %26 = vector.broadcast %14 : i32 to vector<8x8xi32>
    %27 = arith.addi %16, %26 : vector<8x8xi32>
    %28 = arith.select %25, %27, %16 : vector<8x8xi1>, vector<8x8xi32>
    %c4_i32_8 = arith.constant 4 : i32
    %c0_i32_9 = arith.constant 0 : i32
    %29 = arith.cmpi eq, %c4_i32_8, %c0_i32_9 : i32
    %c1_i32_10 = arith.constant 1 : i32
    %30 = arith.select %29, %c1_i32_10, %c4_i32_8 : i32
    %31 = vector.broadcast %30 : i32 to vector<8x8xi32>
    %32 = arith.remsi %12, %31 : vector<8x8xi32>
    %c0_i32_11 = arith.constant 0 : i32
    %33 = vector.broadcast %c0_i32_11 : i32 to vector<8x8xi32>
    %34 = arith.cmpi ne, %32, %33 : vector<8x8xi32>
    %c0_i32_12 = arith.constant 0 : i32
    %35 = vector.broadcast %c0_i32_12 : i32 to vector<8x8xi32>
    %36 = arith.cmpi slt, %32, %35 : vector<8x8xi32>
    %c0_i32_13 = arith.constant 0 : i32
    %37 = arith.cmpi slt, %30, %c0_i32_13 : i32
    %38 = vector.broadcast %37 : i1 to vector<8x8xi1>
    %39 = vector.broadcast %38 : vector<8x8xi1> to vector<8x8xi1>
    %40 = arith.xori %36, %39 : vector<8x8xi1>
    %41 = arith.andi %40, %34 : vector<8x8xi1>
    %42 = vector.broadcast %30 : i32 to vector<8x8xi32>
    %43 = arith.addi %32, %42 : vector<8x8xi32>
    %44 = arith.select %41, %43, %32 : vector<8x8xi1>, vector<8x8xi32>
    %45 = arith.cmpi eq, %28, %44 : vector<8x8xi32>
    %46 = vector.extract_strided_slice %8 {offsets = [0, 0], sizes = [8, 3], strides = [1, 1]} : vector<8x6xf32> to vector<8x3xf32>
    %cst_14 = arith.constant 0.577350259 : f32
    %47 = vector.broadcast %cst_14 : f32 to vector<8x3xf32>
    %48 = arith.mulf %46, %47 : vector<8x3xf32>
    %49 = arith.truncf %48 : vector<8x3xf32> to vector<8x3xbf16>
    %50 = vector.extract_strided_slice %9 {offsets = [0, 0], sizes = [8, 3], strides = [1, 1]} : vector<8x6xf32> to vector<8x3xf32>
    %51 = arith.truncf %50 : vector<8x3xf32> to vector<8x3xbf16>
    %52 = vector.extract_strided_slice %10 {offsets = [0, 0], sizes = [8, 3], strides = [1, 1]} : vector<8x6xf32> to vector<8x3xf32>
    %53 = arith.truncf %52 : vector<8x3xf32> to vector<8x3xbf16>
    %cst_15 = arith.constant dense<0.000000e+00> : vector<8x8xf32>
    %54 = tpu.matmul %49, %51, %cst_15 {dimension_numbers = #tpu.dot_dimension_numbers<[1], [1], [0], [0], [0, 0, 1, 0], [], []>} : vector<8x3xbf16>, vector<8x3xbf16>, vector<8x8xf32> -> vector<8x8xf32>
    %cst_16 = arith.constant -1.000000e+30 : f32
    %55 = vector.broadcast %cst_16 : f32 to vector<8x8xf32>
    %56 = arith.select %45, %54, %55 : vector<8x8xi1>, vector<8x8xf32>
    %cst_17 = arith.constant dense<0xFF800000> : vector<8xf32>
    %57 = vector.multi_reduction <maximumf>, %56, %cst_17 [1] : vector<8x8xf32> to vector<8xf32>
    %58 = vector.shape_cast %57 : vector<8xf32> to vector<8x1xf32>
    %59 = vector.broadcast %58 : vector<8x1xf32> to vector<8x8xf32>
    %60 = arith.subf %56, %59 : vector<8x8xf32>
    %61 = math.exp %60 : vector<8x8xf32>
    %cst_18 = arith.constant dense<0.000000e+00> : vector<8xf32>
    %62 = vector.multi_reduction <add>, %61, %cst_18 [1] : vector<8x8xf32> to vector<8xf32>
    %63 = vector.shape_cast %62 : vector<8xf32> to vector<8x1xf32>
    %64 = tpu.reciprocal %63 {approx = true} : vector<8x1xf32> -> vector<8x1xf32>
    %65 = vector.broadcast %64 : vector<8x1xf32> to vector<8x8xf32>
    %66 = arith.mulf %61, %65 : vector<8x8xf32>
    %67 = arith.truncf %66 : vector<8x8xf32> to vector<8x8xbf16>
    %cst_19 = arith.constant dense<0.000000e+00> : vector<8x3xf32>
    %68 = tpu.matmul %67, %53, %cst_19 {dimension_numbers = #tpu.dot_dimension_numbers<[1], [0], [0], [1], [0, 0, 1, 1], [], []>} : vector<8x8xbf16>, vector<8x3xbf16>, vector<8x3xf32> -> vector<8x3xf32>
    %69 = vector.extract_strided_slice %8 {offsets = [0, 3], sizes = [8, 3], strides = [1, 1]} : vector<8x6xf32> to vector<8x3xf32>
    %cst_20 = arith.constant 0.577350259 : f32
    %70 = vector.broadcast %cst_20 : f32 to vector<8x3xf32>
    %71 = arith.mulf %69, %70 : vector<8x3xf32>
    %72 = arith.truncf %71 : vector<8x3xf32> to vector<8x3xbf16>
    %73 = vector.extract_strided_slice %9 {offsets = [0, 3], sizes = [8, 3], strides = [1, 1]} : vector<8x6xf32> to vector<8x3xf32>
    %74 = arith.truncf %73 : vector<8x3xf32> to vector<8x3xbf16>
    %75 = vector.extract_strided_slice %10 {offsets = [0, 3], sizes = [8, 3], strides = [1, 1]} : vector<8x6xf32> to vector<8x3xf32>
    %76 = arith.truncf %75 : vector<8x3xf32> to vector<8x3xbf16>
    %cst_21 = arith.constant dense<0.000000e+00> : vector<8x8xf32>
    %77 = tpu.matmul %72, %74, %cst_21 {dimension_numbers = #tpu.dot_dimension_numbers<[1], [1], [0], [0], [0, 0, 1, 0], [], []>} : vector<8x3xbf16>, vector<8x3xbf16>, vector<8x8xf32> -> vector<8x8xf32>
    %cst_22 = arith.constant -1.000000e+30 : f32
    %78 = vector.broadcast %cst_22 : f32 to vector<8x8xf32>
    %79 = arith.select %45, %77, %78 : vector<8x8xi1>, vector<8x8xf32>
    %cst_23 = arith.constant dense<0xFF800000> : vector<8xf32>
    %80 = vector.multi_reduction <maximumf>, %79, %cst_23 [1] : vector<8x8xf32> to vector<8xf32>
    %81 = vector.shape_cast %80 : vector<8xf32> to vector<8x1xf32>
    %82 = vector.broadcast %81 : vector<8x1xf32> to vector<8x8xf32>
    %83 = arith.subf %79, %82 : vector<8x8xf32>
    %84 = math.exp %83 : vector<8x8xf32>
    %cst_24 = arith.constant dense<0.000000e+00> : vector<8xf32>
    %85 = vector.multi_reduction <add>, %84, %cst_24 [1] : vector<8x8xf32> to vector<8xf32>
    %86 = vector.shape_cast %85 : vector<8xf32> to vector<8x1xf32>
    %87 = tpu.reciprocal %86 {approx = true} : vector<8x1xf32> -> vector<8x1xf32>
    %88 = vector.broadcast %87 : vector<8x1xf32> to vector<8x8xf32>
    %89 = arith.mulf %84, %88 : vector<8x8xf32>
    %90 = arith.truncf %89 : vector<8x8xf32> to vector<8x8xbf16>
    %cst_25 = arith.constant dense<0.000000e+00> : vector<8x3xf32>
    %91 = tpu.matmul %90, %76, %cst_25 {dimension_numbers = #tpu.dot_dimension_numbers<[1], [0], [0], [1], [0, 0, 1, 1], [], []>} : vector<8x8xbf16>, vector<8x3xbf16>, vector<8x3xf32> -> vector<8x3xf32>
    %92 = tpu.concatenate %68, %91 in 1 : vector<8x3xf32>, vector<8x3xf32> -> vector<8x6xf32>
    %93 = arith.truncf %92 : vector<8x6xf32> to vector<8x6xbf16>
    %c0_26 = arith.constant 0 : index
    %c0_27 = arith.constant 0 : index
    %94 = vector.load %arg4[%c0_26, %c0_27] : memref<6x6xf32, #tpu.memory_space<vmem>>, vector<6x6xf32>
    %95 = arith.truncf %94 : vector<6x6xf32> to vector<6x6xbf16>
    %cst_28 = arith.constant dense<0.000000e+00> : vector<8x6xf32>
    %96 = tpu.matmul %93, %95, %cst_28 {dimension_numbers = #tpu.dot_dimension_numbers<[1], [0], [0], [1], [0, 0, 1, 1], [], []>} : vector<8x6xbf16>, vector<6x6xbf16>, vector<8x6xf32> -> vector<8x6xf32>
    %c0_29 = arith.constant 0 : index
    %c0_30 = arith.constant 0 : index
    %97 = vector.load %arg5[%c0_29, %c0_30] : memref<1x6xf32, #tpu.memory_space<vmem>>, vector<1x6xf32>
    %98 = vector.broadcast %97 : vector<1x6xf32> to vector<8x6xf32>
    %99 = arith.addf %96, %98 : vector<8x6xf32>
    %100 = arith.addf %0, %99 : vector<8x6xf32>
    %c0_31 = arith.constant 0 : index
    %c0_32 = arith.constant 0 : index
    %101 = vector.load %arg10[%c0_31, %c0_32] : memref<1x6xf32, #tpu.memory_space<vmem>>, vector<1x6xf32>
    %c0_33 = arith.constant 0 : index
    %c0_34 = arith.constant 0 : index
    %102 = vector.load %arg11[%c0_33, %c0_34] : memref<1x6xf32, #tpu.memory_space<vmem>>, vector<1x6xf32>
    %cst_35 = arith.constant dense<0.000000e+00> : vector<8xf32>
    %103 = vector.multi_reduction <add>, %100, %cst_35 [1] : vector<8x6xf32> to vector<8xf32>
    %104 = vector.shape_cast %103 : vector<8xf32> to vector<8x1xf32>
    %cst_36 = arith.constant 6.000000e+00 : f32
    %105 = vector.broadcast %cst_36 : f32 to vector<8x1xf32>
    %106 = arith.divf %104, %105 : vector<8x1xf32>
    %107 = vector.broadcast %106 : vector<8x1xf32> to vector<8x6xf32>
    %108 = arith.subf %100, %107 : vector<8x6xf32>
    %109 = arith.mulf %108, %108 : vector<8x6xf32>
    %cst_37 = arith.constant dense<0.000000e+00> : vector<8xf32>
    %110 = vector.multi_reduction <add>, %109, %cst_37 [1] : vector<8x6xf32> to vector<8xf32>
    %111 = vector.shape_cast %110 : vector<8xf32> to vector<8x1xf32>
    %cst_38 = arith.constant 6.000000e+00 : f32
    %112 = vector.broadcast %cst_38 : f32 to vector<8x1xf32>
    %113 = arith.divf %111, %112 : vector<8x1xf32>
    %114 = vector.broadcast %106 : vector<8x1xf32> to vector<8x6xf32>
    %115 = arith.subf %100, %114 : vector<8x6xf32>
    %cst_39 = arith.constant 9.99999974E-6 : f32
    %116 = vector.broadcast %cst_39 : f32 to vector<8x1xf32>
    %117 = arith.addf %113, %116 : vector<8x1xf32>
    %118 = math.rsqrt %117 : vector<8x1xf32>
    %119 = vector.broadcast %118 : vector<8x1xf32> to vector<8x6xf32>
    %120 = arith.mulf %115, %119 : vector<8x6xf32>
    %121 = vector.broadcast %101 : vector<1x6xf32> to vector<8x6xf32>
    %122 = arith.mulf %120, %121 : vector<8x6xf32>
    %123 = vector.broadcast %102 : vector<1x6xf32> to vector<8x6xf32>
    %124 = arith.addf %122, %123 : vector<8x6xf32>
    %125 = arith.truncf %124 : vector<8x6xf32> to vector<8x6xbf16>
    %c0_40 = arith.constant 0 : index
    %c0_41 = arith.constant 0 : index
    %126 = vector.load %arg6[%c0_40, %c0_41] : memref<6x32xf32, #tpu.memory_space<vmem>>, vector<6x32xf32>
    %127 = arith.truncf %126 : vector<6x32xf32> to vector<6x32xbf16>
    %cst_42 = arith.constant dense<0.000000e+00> : vector<8x32xf32>
    %128 = tpu.matmul %125, %127, %cst_42 {dimension_numbers = #tpu.dot_dimension_numbers<[1], [0], [0], [1], [0, 0, 1, 1], [], []>} : vector<8x6xbf16>, vector<6x32xbf16>, vector<8x32xf32> -> vector<8x32xf32>
    %c0_43 = arith.constant 0 : index
    %c0_44 = arith.constant 0 : index
    %129 = vector.load %arg7[%c0_43, %c0_44] : memref<1x32xf32, #tpu.memory_space<vmem>>, vector<1x32xf32>
    %130 = vector.broadcast %129 : vector<1x32xf32> to vector<8x32xf32>
    %131 = arith.addf %128, %130 : vector<8x32xf32>
    %cst_45 = arith.constant 0.000000e+00 : f32
    %132 = vector.broadcast %cst_45 : f32 to vector<8x32xf32>
    %133 = arith.maximumf %131, %132 : vector<8x32xf32>
    %134 = arith.truncf %133 : vector<8x32xf32> to vector<8x32xbf16>
    %c0_46 = arith.constant 0 : index
    %c0_47 = arith.constant 0 : index
    %135 = vector.load %arg8[%c0_46, %c0_47] : memref<32x6xf32, #tpu.memory_space<vmem>>, vector<32x6xf32>
    %136 = arith.truncf %135 : vector<32x6xf32> to vector<32x6xbf16>
    %cst_48 = arith.constant dense<0.000000e+00> : vector<8x6xf32>
    %137 = tpu.matmul %134, %136, %cst_48 {dimension_numbers = #tpu.dot_dimension_numbers<[1], [0], [0], [1], [0, 0, 1, 1], [], []>} : vector<8x32xbf16>, vector<32x6xbf16>, vector<8x6xf32> -> vector<8x6xf32>
    %c0_49 = arith.constant 0 : index
    %c0_50 = arith.constant 0 : index
    %138 = vector.load %arg9[%c0_49, %c0_50] : memref<1x6xf32, #tpu.memory_space<vmem>>, vector<1x6xf32>
    %139 = vector.broadcast %138 : vector<1x6xf32> to vector<8x6xf32>
    %140 = arith.addf %137, %139 : vector<8x6xf32>
    %141 = arith.addf %124, %140 : vector<8x6xf32>
    %c0_51 = arith.constant 0 : index
    %c0_52 = arith.constant 0 : index
    %142 = vector.load %arg12[%c0_51, %c0_52] : memref<1x6xf32, #tpu.memory_space<vmem>>, vector<1x6xf32>
    %c0_53 = arith.constant 0 : index
    %c0_54 = arith.constant 0 : index
    %143 = vector.load %arg13[%c0_53, %c0_54] : memref<1x6xf32, #tpu.memory_space<vmem>>, vector<1x6xf32>
    %cst_55 = arith.constant dense<0.000000e+00> : vector<8xf32>
    %144 = vector.multi_reduction <add>, %141, %cst_55 [1] : vector<8x6xf32> to vector<8xf32>
    %145 = vector.shape_cast %144 : vector<8xf32> to vector<8x1xf32>
    %cst_56 = arith.constant 6.000000e+00 : f32
    %146 = vector.broadcast %cst_56 : f32 to vector<8x1xf32>
    %147 = arith.divf %145, %146 : vector<8x1xf32>
    %148 = vector.broadcast %147 : vector<8x1xf32> to vector<8x6xf32>
    %149 = arith.subf %141, %148 : vector<8x6xf32>
    %150 = arith.mulf %149, %149 : vector<8x6xf32>
    %cst_57 = arith.constant dense<0.000000e+00> : vector<8xf32>
    %151 = vector.multi_reduction <add>, %150, %cst_57 [1] : vector<8x6xf32> to vector<8xf32>
    %152 = vector.shape_cast %151 : vector<8xf32> to vector<8x1xf32>
    %cst_58 = arith.constant 6.000000e+00 : f32
    %153 = vector.broadcast %cst_58 : f32 to vector<8x1xf32>
    %154 = arith.divf %152, %153 : vector<8x1xf32>
    %155 = vector.broadcast %147 : vector<8x1xf32> to vector<8x6xf32>
    %156 = arith.subf %141, %155 : vector<8x6xf32>
    %cst_59 = arith.constant 9.99999974E-6 : f32
    %157 = vector.broadcast %cst_59 : f32 to vector<8x1xf32>
    %158 = arith.addf %154, %157 : vector<8x1xf32>
    %159 = math.rsqrt %158 : vector<8x1xf32>
    %160 = vector.broadcast %159 : vector<8x1xf32> to vector<8x6xf32>
    %161 = arith.mulf %156, %160 : vector<8x6xf32>
    %162 = vector.broadcast %142 : vector<1x6xf32> to vector<8x6xf32>
    %163 = arith.mulf %161, %162 : vector<8x6xf32>
    %164 = vector.broadcast %143 : vector<1x6xf32> to vector<8x6xf32>
    %165 = arith.addf %163, %164 : vector<8x6xf32>
    %c0_60 = arith.constant 0 : index
    %c0_61 = arith.constant 0 : index
    %166 = vector.load %arg14[%c0_60, %c0_61] : memref<8x6xf32, #tpu.memory_space<vmem>>, vector<8x6xf32>
    tpu.vector_store %arg14[%c0_60, %c0_61], %165 {strides = array<i32>} : memref<8x6xf32, #tpu.memory_space<vmem>>, vector<8x6xf32>,
    return
  }
  func.func @transform_0(%arg0: i32) -> (i32, i32) {
    %c0_i32 = arith.constant 0 : i32
    %c0_i32_0 = arith.constant 0 : i32
    %c0_i32_1 = arith.constant 0 : i32
    return %c0_i32, %c0_i32_0 : i32, i32
  }
  func.func @transform_1(%arg0: i32) -> (i32, i32) {
    %c0_i32 = arith.constant 0 : i32
    %c0_i32_0 = arith.constant 0 : i32
    %c0_i32_1 = arith.constant 0 : i32
    return %c0_i32, %c0_i32_0 : i32, i32
  }
  func.func @transform_2(%arg0: i32) -> (i32, i32) {
    %c0_i32 = arith.constant 0 : i32
    %c0_i32_0 = arith.constant 0 : i32
    %c0_i32_1 = arith.constant 0 : i32
    return %c0_i32, %c0_i32_0 : i32, i32
  }
  func.func @transform_3(%arg0: i32) -> (i32, i32) {
    %c0_i32 = arith.constant 0 : i32
    %c0_i32_0 = arith.constant 0 : i32
    %c0_i32_1 = arith.constant 0 : i32
    return %c0_i32, %c0_i32_0 : i32, i32
  }
  func.func @transform_4(%arg0: i32) -> (i32, i32) {
    %c0_i32 = arith.constant 0 : i32
    %c0_i32_0 = arith.constant 0 : i32
    %c0_i32_1 = arith.constant 0 : i32
    return %c0_i32, %c0_i32_0 : i32, i32
  }
  func.func @transform_5(%arg0: i32) -> (i32, i32) {
    %c0_i32 = arith.constant 0 : i32
    %c0_i32_0 = arith.constant 0 : i32
    %c0_i32_1 = arith.constant 0 : i32
    return %c0_i32, %c0_i32_0 : i32, i32
  }
  func.func @transform_6(%arg0: i32) -> (i32, i32) {
    %c0_i32 = arith.constant 0 : i32
    %c0_i32_0 = arith.constant 0 : i32
    %c0_i32_1 = arith.constant 0 : i32
    return %c0_i32, %c0_i32_0 : i32, i32
  }
  func.func @transform_7(%arg0: i32) -> (i32, i32) {
    %c0_i32 = arith.constant 0 : i32
    %c0_i32_0 = arith.constant 0 : i32
    %c0_i32_1 = arith.constant 0 : i32
    return %c0_i32, %c0_i32_0 : i32, i32
  }
  func.func @transform_8(%arg0: i32) -> (i32, i32) {
    %c0_i32 = arith.constant 0 : i32
    %c0_i32_0 = arith.constant 0 : i32
    %c0_i32_1 = arith.constant 0 : i32
    return %c0_i32, %c0_i32_0 : i32, i32
  }
  func.func @transform_9(%arg0: i32) -> (i32, i32) {
    %c0_i32 = arith.constant 0 : i32
    %c0_i32_0 = arith.constant 0 : i32
    %c0_i32_1 = arith.constant 0 : i32
    return %c0_i32, %c0_i32_0 : i32, i32
  }
  func.func @transform_10(%arg0: i32) -> (i32, i32) {
    %c0_i32 = arith.constant 0 : i32
    %c0_i32_0 = arith.constant 0 : i32
    %c0_i32_1 = arith.constant 0 : i32
    return %c0_i32, %c0_i32_0 : i32, i32
  }
  func.func @transform_11(%arg0: i32) -> (i32, i32) {
    %c0_i32 = arith.constant 0 : i32
    %c0_i32_0 = arith.constant 0 : i32
    %c0_i32_1 = arith.constant 0 : i32
    return %c0_i32, %c0_i32_0 : i32, i32
  }
  func.func @transform_12(%arg0: i32) -> (i32, i32) {
    %c0_i32 = arith.constant 0 : i32
    %c0_i32_0 = arith.constant 0 : i32
    %c0_i32_1 = arith.constant 0 : i32
    return %c0_i32, %c0_i32_0 : i32, i32
  }
  func.func @transform_13(%arg0: i32) -> (i32, i32) {
    %c0_i32 = arith.constant 0 : i32
    %c0_i32_0 = arith.constant 0 : i32
    %c0_i32_1 = arith.constant 0 : i32
    return %c0_i32, %c0_i32_0 : i32, i32
  }
}

module attributes {stable_mosaic.version = 11 : i64} {
  func.func @_fused_mlp_kernel(%arg0: i32, %arg1: memref<12x4xf32, #tpu.memory_space<vmem>>, %arg2: memref<4x5xf32, #tpu.memory_space<vmem>>, %arg3: memref<1x5xf32, #tpu.memory_space<vmem>>, %arg4: memref<12x5xf32, #tpu.memory_space<vmem>>) attributes {dimension_semantics = [#tpu.dimension_semantics<parallel>], iteration_bounds = array<i64: 1>, scalar_prefetch = 0 : i64, scratch_operands = 0 : i64, tpu.core_type = #tpu.core_type<tc>, window_params = [{transform_indices = @transform_0, window_bounds = array<i64: 12, 4>}, {pipeline_mode = #tpu.pipeline_mode<synchronous>, transform_indices = @transform_1, window_bounds = array<i64: 4, 5>}, {pipeline_mode = #tpu.pipeline_mode<synchronous>, transform_indices = @transform_2, window_bounds = array<i64: 1, 5>}, {transform_indices = @transform_3, window_bounds = array<i64: 12, 5>}]} {
    %c0 = arith.constant 0 : index
    %c0_0 = arith.constant 0 : index
    %0 = vector.load %arg1[%c0, %c0_0] : memref<12x4xf32, #tpu.memory_space<vmem>>, vector<12x4xf32>
    %c0_1 = arith.constant 0 : index
    %c0_2 = arith.constant 0 : index
    %1 = vector.load %arg2[%c0_1, %c0_2] : memref<4x5xf32, #tpu.memory_space<vmem>>, vector<4x5xf32>
    %c0_3 = arith.constant 0 : index
    %c0_4 = arith.constant 0 : index
    %2 = vector.load %arg3[%c0_3, %c0_4] : memref<1x5xf32, #tpu.memory_space<vmem>>, vector<1x5xf32>
    %3 = arith.truncf %0 : vector<12x4xf32> to vector<12x4xbf16>
    %4 = arith.truncf %1 : vector<4x5xf32> to vector<4x5xbf16>
    %cst = arith.constant dense<0.000000e+00> : vector<12x5xf32>
    %5 = tpu.matmul %3, %4, %cst {dimension_numbers = #tpu.dot_dimension_numbers<[1], [0], [0], [1], [0, 0, 1, 1], [], []>} : vector<12x4xbf16>, vector<4x5xbf16>, vector<12x5xf32> -> vector<12x5xf32>
    %6 = vector.broadcast %2 : vector<1x5xf32> to vector<12x5xf32>
    %7 = arith.addf %5, %6 : vector<12x5xf32>
    %c0_5 = arith.constant 0 : index
    %c0_6 = arith.constant 0 : index
    %8 = vector.load %arg4[%c0_5, %c0_6] : memref<12x5xf32, #tpu.memory_space<vmem>>, vector<12x5xf32>
    tpu.vector_store %arg4[%c0_5, %c0_6], %7 {strides = array<i32>} : memref<12x5xf32, #tpu.memory_space<vmem>>, vector<12x5xf32>,
    return
  }
  func.func @transform_0(%arg0: i32) -> (i32, i32) {
    %c0_i32 = arith.constant 0 : i32
    %c0_i32_0 = arith.constant 0 : i32
    return %arg0, %c0_i32 : i32, i32
  }
  func.func @transform_1(%arg0: i32) -> (i32, i32) {
    %c0_i32 = arith.constant 0 : i32
    %c0_i32_0 = arith.constant 0 : i32
    %c0_i32_1 = arith.constant 0 : i32
    return %c0_i32, %c0_i32_0 : i32, i32
  }
  func.func @transform_2(%arg0: i32) -> (i32, i32) {
    %c0_i32 = arith.constant 0 : i32
    %c0_i32_0 = arith.constant 0 : i32
    %c0_i32_1 = arith.constant 0 : i32
    return %c0_i32, %c0_i32_0 : i32, i32
  }
  func.func @transform_3(%arg0: i32) -> (i32, i32) {
    %c0_i32 = arith.constant 0 : i32
    %c0_i32_0 = arith.constant 0 : i32
    return %arg0, %c0_i32 : i32, i32
  }
}

module attributes {stable_mosaic.version = 11 : i64} {
  func.func @_fused_mlp_kernel(%arg0: i32, %arg1: memref<16x6xf32, #tpu.memory_space<vmem>>, %arg2: memref<6x256xf32, #tpu.memory_space<vmem>>, %arg3: memref<1x256xf32, #tpu.memory_space<vmem>>, %arg4: memref<256x256xf32, #tpu.memory_space<vmem>>, %arg5: memref<1x256xf32, #tpu.memory_space<vmem>>, %arg6: memref<256x256xf32, #tpu.memory_space<vmem>>, %arg7: memref<1x256xf32, #tpu.memory_space<vmem>>, %arg8: memref<256x7xf32, #tpu.memory_space<vmem>>, %arg9: memref<1x7xf32, #tpu.memory_space<vmem>>, %arg10: memref<16x7xf32, #tpu.memory_space<vmem>>) attributes {dimension_semantics = [#tpu.dimension_semantics<parallel>], iteration_bounds = array<i64: 1>, scalar_prefetch = 0 : i64, scratch_operands = 0 : i64, tpu.core_type = #tpu.core_type<tc>, window_params = [{transform_indices = @transform_0, window_bounds = array<i64: 16, 6>}, {pipeline_mode = #tpu.pipeline_mode<synchronous>, transform_indices = @transform_1, window_bounds = array<i64: 6, 256>}, {pipeline_mode = #tpu.pipeline_mode<synchronous>, transform_indices = @transform_2, window_bounds = array<i64: 1, 256>}, {pipeline_mode = #tpu.pipeline_mode<synchronous>, transform_indices = @transform_3, window_bounds = array<i64: 256, 256>}, {pipeline_mode = #tpu.pipeline_mode<synchronous>, transform_indices = @transform_4, window_bounds = array<i64: 1, 256>}, {pipeline_mode = #tpu.pipeline_mode<synchronous>, transform_indices = @transform_5, window_bounds = array<i64: 256, 256>}, {pipeline_mode = #tpu.pipeline_mode<synchronous>, transform_indices = @transform_6, window_bounds = array<i64: 1, 256>}, {pipeline_mode = #tpu.pipeline_mode<synchronous>, transform_indices = @transform_7, window_bounds = array<i64: 256, 7>}, {pipeline_mode = #tpu.pipeline_mode<synchronous>, transform_indices = @transform_8, window_bounds = array<i64: 1, 7>}, {transform_indices = @transform_9, window_bounds = array<i64: 16, 7>}]} {
    %c0 = arith.constant 0 : index
    %c0_0 = arith.constant 0 : index
    %0 = vector.load %arg1[%c0, %c0_0] : memref<16x6xf32, #tpu.memory_space<vmem>>, vector<16x6xf32>
    %c0_1 = arith.constant 0 : index
    %c0_2 = arith.constant 0 : index
    %1 = vector.load %arg2[%c0_1, %c0_2] : memref<6x256xf32, #tpu.memory_space<vmem>>, vector<6x256xf32>
    %c0_3 = arith.constant 0 : index
    %c0_4 = arith.constant 0 : index
    %2 = vector.load %arg3[%c0_3, %c0_4] : memref<1x256xf32, #tpu.memory_space<vmem>>, vector<1x256xf32>
    %3 = arith.truncf %0 : vector<16x6xf32> to vector<16x6xbf16>
    %4 = arith.truncf %1 : vector<6x256xf32> to vector<6x256xbf16>
    %cst = arith.constant dense<0.000000e+00> : vector<16x256xf32>
    %5 = tpu.matmul %3, %4, %cst {dimension_numbers = #tpu.dot_dimension_numbers<[1], [0], [0], [1], [0, 0, 1, 1], [], []>} : vector<16x6xbf16>, vector<6x256xbf16>, vector<16x256xf32> -> vector<16x256xf32>
    %6 = vector.broadcast %2 : vector<1x256xf32> to vector<16x256xf32>
    %7 = arith.addf %5, %6 : vector<16x256xf32>
    %cst_5 = arith.constant 0.000000e+00 : f32
    %8 = vector.broadcast %cst_5 : f32 to vector<16x256xf32>
    %9 = arith.maximumf %7, %8 : vector<16x256xf32>
    %c0_6 = arith.constant 0 : index
    %c0_7 = arith.constant 0 : index
    %10 = vector.load %arg4[%c0_6, %c0_7] : memref<256x256xf32, #tpu.memory_space<vmem>>, vector<256x256xf32>
    %c0_8 = arith.constant 0 : index
    %c0_9 = arith.constant 0 : index
    %11 = vector.load %arg5[%c0_8, %c0_9] : memref<1x256xf32, #tpu.memory_space<vmem>>, vector<1x256xf32>
    %12 = arith.truncf %9 : vector<16x256xf32> to vector<16x256xbf16>
    %13 = arith.truncf %10 : vector<256x256xf32> to vector<256x256xbf16>
    %cst_10 = arith.constant dense<0.000000e+00> : vector<16x256xf32>
    %14 = tpu.matmul %12, %13, %cst_10 {dimension_numbers = #tpu.dot_dimension_numbers<[1], [0], [0], [1], [0, 0, 1, 1], [], []>} : vector<16x256xbf16>, vector<256x256xbf16>, vector<16x256xf32> -> vector<16x256xf32>
    %15 = vector.broadcast %11 : vector<1x256xf32> to vector<16x256xf32>
    %16 = arith.addf %14, %15 : vector<16x256xf32>
    %cst_11 = arith.constant 0.000000e+00 : f32
    %17 = vector.broadcast %cst_11 : f32 to vector<16x256xf32>
    %18 = arith.maximumf %16, %17 : vector<16x256xf32>
    %c0_12 = arith.constant 0 : index
    %c0_13 = arith.constant 0 : index
    %19 = vector.load %arg6[%c0_12, %c0_13] : memref<256x256xf32, #tpu.memory_space<vmem>>, vector<256x256xf32>
    %c0_14 = arith.constant 0 : index
    %c0_15 = arith.constant 0 : index
    %20 = vector.load %arg7[%c0_14, %c0_15] : memref<1x256xf32, #tpu.memory_space<vmem>>, vector<1x256xf32>
    %21 = arith.truncf %18 : vector<16x256xf32> to vector<16x256xbf16>
    %22 = arith.truncf %19 : vector<256x256xf32> to vector<256x256xbf16>
    %cst_16 = arith.constant dense<0.000000e+00> : vector<16x256xf32>
    %23 = tpu.matmul %21, %22, %cst_16 {dimension_numbers = #tpu.dot_dimension_numbers<[1], [0], [0], [1], [0, 0, 1, 1], [], []>} : vector<16x256xbf16>, vector<256x256xbf16>, vector<16x256xf32> -> vector<16x256xf32>
    %24 = vector.broadcast %20 : vector<1x256xf32> to vector<16x256xf32>
    %25 = arith.addf %23, %24 : vector<16x256xf32>
    %cst_17 = arith.constant 0.000000e+00 : f32
    %26 = vector.broadcast %cst_17 : f32 to vector<16x256xf32>
    %27 = arith.maximumf %25, %26 : vector<16x256xf32>
    %c0_18 = arith.constant 0 : index
    %c0_19 = arith.constant 0 : index
    %28 = vector.load %arg8[%c0_18, %c0_19] : memref<256x7xf32, #tpu.memory_space<vmem>>, vector<256x7xf32>
    %c0_20 = arith.constant 0 : index
    %c0_21 = arith.constant 0 : index
    %29 = vector.load %arg9[%c0_20, %c0_21] : memref<1x7xf32, #tpu.memory_space<vmem>>, vector<1x7xf32>
    %30 = arith.truncf %27 : vector<16x256xf32> to vector<16x256xbf16>
    %31 = arith.truncf %28 : vector<256x7xf32> to vector<256x7xbf16>
    %cst_22 = arith.constant dense<0.000000e+00> : vector<16x7xf32>
    %32 = tpu.matmul %30, %31, %cst_22 {dimension_numbers = #tpu.dot_dimension_numbers<[1], [0], [0], [1], [0, 0, 1, 1], [], []>} : vector<16x256xbf16>, vector<256x7xbf16>, vector<16x7xf32> -> vector<16x7xf32>
    %33 = vector.broadcast %29 : vector<1x7xf32> to vector<16x7xf32>
    %34 = arith.addf %32, %33 : vector<16x7xf32>
    %c0_23 = arith.constant 0 : index
    %c0_24 = arith.constant 0 : index
    %35 = vector.load %arg10[%c0_23, %c0_24] : memref<16x7xf32, #tpu.memory_space<vmem>>, vector<16x7xf32>
    tpu.vector_store %arg10[%c0_23, %c0_24], %34 {strides = array<i32>} : memref<16x7xf32, #tpu.memory_space<vmem>>, vector<16x7xf32>,
    return
  }
  func.func @transform_0(%arg0: i32) -> (i32, i32) {
    %c0_i32 = arith.constant 0 : i32
    %c0_i32_0 = arith.constant 0 : i32
    return %arg0, %c0_i32 : i32, i32
  }
  func.func @transform_1(%arg0: i32) -> (i32, i32) {
    %c0_i32 = arith.constant 0 : i32
    %c0_i32_0 = arith.constant 0 : i32
    %c0_i32_1 = arith.constant 0 : i32
    return %c0_i32, %c0_i32_0 : i32, i32
  }
  func.func @transform_2(%arg0: i32) -> (i32, i32) {
    %c0_i32 = arith.constant 0 : i32
    %c0_i32_0 = arith.constant 0 : i32
    %c0_i32_1 = arith.constant 0 : i32
    return %c0_i32, %c0_i32_0 : i32, i32
  }
  func.func @transform_3(%arg0: i32) -> (i32, i32) {
    %c0_i32 = arith.constant 0 : i32
    %c0_i32_0 = arith.constant 0 : i32
    %c0_i32_1 = arith.constant 0 : i32
    return %c0_i32, %c0_i32_0 : i32, i32
  }
  func.func @transform_4(%arg0: i32) -> (i32, i32) {
    %c0_i32 = arith.constant 0 : i32
    %c0_i32_0 = arith.constant 0 : i32
    %c0_i32_1 = arith.constant 0 : i32
    return %c0_i32, %c0_i32_0 : i32, i32
  }
  func.func @transform_5(%arg0: i32) -> (i32, i32) {
    %c0_i32 = arith.constant 0 : i32
    %c0_i32_0 = arith.constant 0 : i32
    %c0_i32_1 = arith.constant 0 : i32
    return %c0_i32, %c0_i32_0 : i32, i32
  }
  func.func @transform_6(%arg0: i32) -> (i32, i32) {
    %c0_i32 = arith.constant 0 : i32
    %c0_i32_0 = arith.constant 0 : i32
    %c0_i32_1 = arith.constant 0 : i32
    return %c0_i32, %c0_i32_0 : i32, i32
  }
  func.func @transform_7(%arg0: i32) -> (i32, i32) {
    %c0_i32 = arith.constant 0 : i32
    %c0_i32_0 = arith.constant 0 : i32
    %c0_i32_1 = arith.constant 0 : i32
    return %c0_i32, %c0_i32_0 : i32, i32
  }
  func.func @transform_8(%arg0: i32) -> (i32, i32) {
    %c0_i32 = arith.constant 0 : i32
    %c0_i32_0 = arith.constant 0 : i32
    %c0_i32_1 = arith.constant 0 : i32
    return %c0_i32, %c0_i32_0 : i32, i32
  }
  func.func @transform_9(%arg0: i32) -> (i32, i32) {
    %c0_i32 = arith.constant 0 : i32
    %c0_i32_0 = arith.constant 0 : i32
    return %arg0, %c0_i32 : i32, i32
  }
}

module attributes {stable_mosaic.version = 11 : i64} {
  func.func @_fused_mlp_kernel(%arg0: i32, %arg1: memref<32x6xf32, #tpu.memory_space<vmem>>, %arg2: memref<6x32xf32, #tpu.memory_space<vmem>>, %arg3: memref<1x32xf32, #tpu.memory_space<vmem>>, %arg4: memref<32x32xf32, #tpu.memory_space<vmem>>, %arg5: memref<1x32xf32, #tpu.memory_space<vmem>>, %arg6: memref<32x4xf32, #tpu.memory_space<vmem>>, %arg7: memref<1x4xf32, #tpu.memory_space<vmem>>, %arg8: memref<32x4xf32, #tpu.memory_space<vmem>>) attributes {dimension_semantics = [#tpu.dimension_semantics<parallel>], iteration_bounds = array<i64: 1>, scalar_prefetch = 0 : i64, scratch_operands = 0 : i64, tpu.core_type = #tpu.core_type<tc>, window_params = [{transform_indices = @transform_0, window_bounds = array<i64: 32, 6>}, {pipeline_mode = #tpu.pipeline_mode<synchronous>, transform_indices = @transform_1, window_bounds = array<i64: 6, 32>}, {pipeline_mode = #tpu.pipeline_mode<synchronous>, transform_indices = @transform_2, window_bounds = array<i64: 1, 32>}, {pipeline_mode = #tpu.pipeline_mode<synchronous>, transform_indices = @transform_3, window_bounds = array<i64: 32, 32>}, {pipeline_mode = #tpu.pipeline_mode<synchronous>, transform_indices = @transform_4, window_bounds = array<i64: 1, 32>}, {pipeline_mode = #tpu.pipeline_mode<synchronous>, transform_indices = @transform_5, window_bounds = array<i64: 32, 4>}, {pipeline_mode = #tpu.pipeline_mode<synchronous>, transform_indices = @transform_6, window_bounds = array<i64: 1, 4>}, {transform_indices = @transform_7, window_bounds = array<i64: 32, 4>}]} {
    %c0 = arith.constant 0 : index
    %c0_0 = arith.constant 0 : index
    %0 = vector.load %arg1[%c0, %c0_0] : memref<32x6xf32, #tpu.memory_space<vmem>>, vector<32x6xf32>
    %c0_1 = arith.constant 0 : index
    %c0_2 = arith.constant 0 : index
    %1 = vector.load %arg2[%c0_1, %c0_2] : memref<6x32xf32, #tpu.memory_space<vmem>>, vector<6x32xf32>
    %c0_3 = arith.constant 0 : index
    %c0_4 = arith.constant 0 : index
    %2 = vector.load %arg3[%c0_3, %c0_4] : memref<1x32xf32, #tpu.memory_space<vmem>>, vector<1x32xf32>
    %3 = arith.truncf %0 : vector<32x6xf32> to vector<32x6xbf16>
    %4 = arith.truncf %1 : vector<6x32xf32> to vector<6x32xbf16>
    %cst = arith.constant dense<0.000000e+00> : vector<32x32xf32>
    %5 = tpu.matmul %3, %4, %cst {dimension_numbers = #tpu.dot_dimension_numbers<[1], [0], [0], [1], [0, 0, 1, 1], [], []>} : vector<32x6xbf16>, vector<6x32xbf16>, vector<32x32xf32> -> vector<32x32xf32>
    %6 = vector.broadcast %2 : vector<1x32xf32> to vector<32x32xf32>
    %7 = arith.addf %5, %6 : vector<32x32xf32>
    %cst_5 = arith.constant 0.000000e+00 : f32
    %8 = vector.broadcast %cst_5 : f32 to vector<32x32xf32>
    %9 = arith.maximumf %7, %8 : vector<32x32xf32>
    %c0_6 = arith.constant 0 : index
    %c0_7 = arith.constant 0 : index
    %10 = vector.load %arg4[%c0_6, %c0_7] : memref<32x32xf32, #tpu.memory_space<vmem>>, vector<32x32xf32>
    %c0_8 = arith.constant 0 : index
    %c0_9 = arith.constant 0 : index
    %11 = vector.load %arg5[%c0_8, %c0_9] : memref<1x32xf32, #tpu.memory_space<vmem>>, vector<1x32xf32>
    %12 = arith.truncf %9 : vector<32x32xf32> to vector<32x32xbf16>
    %13 = arith.truncf %10 : vector<32x32xf32> to vector<32x32xbf16>
    %cst_10 = arith.constant dense<0.000000e+00> : vector<32x32xf32>
    %14 = tpu.matmul %12, %13, %cst_10 {dimension_numbers = #tpu.dot_dimension_numbers<[1], [0], [0], [1], [0, 0, 1, 1], [], []>} : vector<32x32xbf16>, vector<32x32xbf16>, vector<32x32xf32> -> vector<32x32xf32>
    %15 = vector.broadcast %11 : vector<1x32xf32> to vector<32x32xf32>
    %16 = arith.addf %14, %15 : vector<32x32xf32>
    %cst_11 = arith.constant 0.000000e+00 : f32
    %17 = vector.broadcast %cst_11 : f32 to vector<32x32xf32>
    %18 = arith.maximumf %16, %17 : vector<32x32xf32>
    %c0_12 = arith.constant 0 : index
    %c0_13 = arith.constant 0 : index
    %19 = vector.load %arg6[%c0_12, %c0_13] : memref<32x4xf32, #tpu.memory_space<vmem>>, vector<32x4xf32>
    %c0_14 = arith.constant 0 : index
    %c0_15 = arith.constant 0 : index
    %20 = vector.load %arg7[%c0_14, %c0_15] : memref<1x4xf32, #tpu.memory_space<vmem>>, vector<1x4xf32>
    %21 = arith.truncf %18 : vector<32x32xf32> to vector<32x32xbf16>
    %22 = arith.truncf %19 : vector<32x4xf32> to vector<32x4xbf16>
    %cst_16 = arith.constant dense<0.000000e+00> : vector<32x4xf32>
    %23 = tpu.matmul %21, %22, %cst_16 {dimension_numbers = #tpu.dot_dimension_numbers<[1], [0], [0], [1], [0, 0, 1, 1], [], []>} : vector<32x32xbf16>, vector<32x4xbf16>, vector<32x4xf32> -> vector<32x4xf32>
    %24 = vector.broadcast %20 : vector<1x4xf32> to vector<32x4xf32>
    %25 = arith.addf %23, %24 : vector<32x4xf32>
    %c0_17 = arith.constant 0 : index
    %c0_18 = arith.constant 0 : index
    %26 = vector.load %arg8[%c0_17, %c0_18] : memref<32x4xf32, #tpu.memory_space<vmem>>, vector<32x4xf32>
    tpu.vector_store %arg8[%c0_17, %c0_18], %25 {strides = array<i32>} : memref<32x4xf32, #tpu.memory_space<vmem>>, vector<32x4xf32>,
    return
  }
  func.func @transform_0(%arg0: i32) -> (i32, i32) {
    %c0_i32 = arith.constant 0 : i32
    %c0_i32_0 = arith.constant 0 : i32
    return %arg0, %c0_i32 : i32, i32
  }
  func.func @transform_1(%arg0: i32) -> (i32, i32) {
    %c0_i32 = arith.constant 0 : i32
    %c0_i32_0 = arith.constant 0 : i32
    %c0_i32_1 = arith.constant 0 : i32
    return %c0_i32, %c0_i32_0 : i32, i32
  }
  func.func @transform_2(%arg0: i32) -> (i32, i32) {
    %c0_i32 = arith.constant 0 : i32
    %c0_i32_0 = arith.constant 0 : i32
    %c0_i32_1 = arith.constant 0 : i32
    return %c0_i32, %c0_i32_0 : i32, i32
  }
  func.func @transform_3(%arg0: i32) -> (i32, i32) {
    %c0_i32 = arith.constant 0 : i32
    %c0_i32_0 = arith.constant 0 : i32
    %c0_i32_1 = arith.constant 0 : i32
    return %c0_i32, %c0_i32_0 : i32, i32
  }
  func.func @transform_4(%arg0: i32) -> (i32, i32) {
    %c0_i32 = arith.constant 0 : i32
    %c0_i32_0 = arith.constant 0 : i32
    %c0_i32_1 = arith.constant 0 : i32
    return %c0_i32, %c0_i32_0 : i32, i32
  }
  func.func @transform_5(%arg0: i32) -> (i32, i32) {
    %c0_i32 = arith.constant 0 : i32
    %c0_i32_0 = arith.constant 0 : i32
    %c0_i32_1 = arith.constant 0 : i32
    return %c0_i32, %c0_i32_0 : i32, i32
  }
  func.func @transform_6(%arg0: i32) -> (i32, i32) {
    %c0_i32 = arith.constant 0 : i32
    %c0_i32_0 = arith.constant 0 : i32
    %c0_i32_1 = arith.constant 0 : i32
    return %c0_i32, %c0_i32_0 : i32, i32
  }
  func.func @transform_7(%arg0: i32) -> (i32, i32) {
    %c0_i32 = arith.constant 0 : i32
    %c0_i32_0 = arith.constant 0 : i32
    return %arg0, %c0_i32 : i32, i32
  }
}

</mosaic_0001>

<llo_original>
// kernel: _lambda_.5
$region0: #{_lambda_.5}
  #allocation0 [shape = 'u32[]', space=smem, size = 0x4, offset = 0x4, fixed_abs, tag = 'smem constant byte address 0x4 - core index']
  #allocation1 [shape = 'u32[144,128]{1,0:T(1,128)}', space=vmem, size = 0x12000, scoped, tag = 'internal scratch']
  %s0 = inlined_call_operand.vmem [shape: f32[16,4], index: 0, kind: input, shape index: {}]
  %s1 = inlined_call_operand.vmem [shape: f32[4,32], index: 1, kind: input, shape index: {}]
  %s2 = inlined_call_operand.vmem [shape: f32[1,32], index: 2, kind: input, shape index: {}]
  %s3 = inlined_call_operand.vmem [shape: f32[32,32], index: 3, kind: input, shape index: {}]
  %s4 = inlined_call_operand.vmem [shape: f32[1,32], index: 4, kind: input, shape index: {}]
  %s5 = inlined_call_operand.vmem [shape: f32[32,32], index: 5, kind: input, shape index: {}]
  %s6 = inlined_call_operand.vmem [shape: f32[1,32], index: 6, kind: input, shape index: {}]
  %s7 = inlined_call_operand.vmem [shape: f32[16,32], index: 7, kind: output, shape index: {}]
  %s8 = sld [smem:[#allocation0]]
  $region38: #{_lambda_.5} parent=0
    _
  %s10 = ssub.s32 1, %s8
  %s11 = scalar_select 0, %s10, %s8
  // Predicated region
  $region2: #{_lambda_.5} parent=0 // pred_check
    _
  $region3: #{_lambda_.5} parent=0 // pred_check_branch
    %13 = sbr.rel (0) target = $region5
  $region4: #{_lambda_.5} parent=0 // pred_region
    _
  $region5: #{_lambda_.5} parent=0 // pred_fallthru
    _
  // Predicated region
  $region6: #{_lambda_.5} parent=0 // pred_check
    _
  $region7: #{_lambda_.5} parent=0 // pred_check_branch
    %15 = sbr.rel (0) target = $region9
  $region8: #{_lambda_.5} parent=0 // pred_region
    _
  $region9: #{_lambda_.5} parent=0 // pred_fallthru
    _
  // Predicated region
  $region10: #{_lambda_.5} parent=0 // pred_check
    _
  $region11: #{_lambda_.5} parent=0 // pred_check_branch
    %17 = sbr.rel (0) target = $region13
  $region12: #{_lambda_.5} parent=0 // pred_region
    _
  $region13: #{_lambda_.5} parent=0 // pred_fallthru
    _
  // Predicated region
  $region14: #{_lambda_.5} parent=0 // pred_check
    _
  $region15: #{_lambda_.5} parent=0 // pred_check_branch
    %19 = sbr.rel (0) target = $region17
  $region16: #{_lambda_.5} parent=0 // pred_region
    _
  $region17: #{_lambda_.5} parent=0 // pred_fallthru
    _
  // Predicated region
  $region18: #{_lambda_.5} parent=0 // pred_check
    _
  $region19: #{_lambda_.5} parent=0 // pred_check_branch
    %21 = sbr.rel (0) target = $region21
  $region20: #{_lambda_.5} parent=0 // pred_region
    _
  $region21: #{_lambda_.5} parent=0 // pred_fallthru
    _
  // Predicated region
  $region22: #{_lambda_.5} parent=0 // pred_check
    _
  $region23: #{_lambda_.5} parent=0 // pred_check_branch
    %23 = sbr.rel (0) target = $region25
  $region24: #{_lambda_.5} parent=0 // pred_region
    _
  $region25: #{_lambda_.5} parent=0 // pred_fallthru
    _
  // Predicated region
  $region26: #{_lambda_.5} parent=0 // pred_check
    _
  $region27: #{_lambda_.5} parent=0 // pred_check_branch
    %25 = sbr.rel (0) target = $region29
  $region28: #{_lambda_.5} parent=0 // pred_region
    _
  $region29: #{_lambda_.5} parent=0 // pred_fallthru
    _
  %v27 = vld [vmem:[%s0] sm:$0xff]
  %v28 = vld [vmem:[%s0 + $0x8] sm:$0xff]
  %v29 = vld [vmem:[%s1] sm:$0xf]
  %v30 = vld [vmem:[%s2] sm:$0x1]
  %v31 = vpack.c.bf16 %v28, %v27
  %v32 = vpack.c.bf16 %v29, %v29
  %v34 = vlaneseq
  %v35 = vshrl.u32 %v34, 7
  %v36 = vsub.s32 0, %v35
  %v37 = vrot.slane %v30, %v36
  %vm39 = vcmask 31744
  %v41 = vsel %vm39, %v31, 0
  %vm43 = vcmask 1041408
  %v45 = vsel %vm43, %v32, 0
  %47 = vmatprep.subr.bf16.mxu0 0
  %48 = vmatpush1.bf16.msra.mxu0 0
  %49 = vmatprep.subr.bf16.mxu0 0
  %50 = vmatpush1.bf16.msra.mxu0 0
  %51 = vmatprep.subr.bf16.mxu0 0
  %52 = vmatpush1.bf16.msra.mxu0 0
  %53 = vmatprep.subr.bf16.mxu0 0
  %54 = vmatpush1.bf16.msra.mxu0 0
  %55 = vmatprep.subr.bf16.mxu0 0
  %56 = vmatpush1.bf16.msra.mxu0 0
  %57 = vmatprep.subr.bf16.mxu0 0
  %58 = vmatpush1.bf16.msra.mxu0 0
  %59 = vmatprep.subr.bf16.mxu0 0
  %60 = vmatpush1.bf16.msra.mxu0 0
  %61 = vmatprep.subr.bf16.mxu0 0
  %62 = vmatpush1.bf16.msra.mxu0 %v45
  %63 = vmatprep.subr.bf16.mxu0 0
  %64 = vmatpush2.bf16.msra.mxu0 0
  %65 = vmatprep.subr.bf16.mxu0 0
  %66 = vmatpush2.bf16.msra.mxu0 0
  %67 = vmatprep.subr.bf16.mxu0 0
  %68 = vmatpush2.bf16.msra.mxu0 0
  %69 = vmatprep.subr.bf16.mxu0 0
  %70 = vmatpush2.bf16.msra.mxu0 0
  %71 = vmatprep.subr.bf16.mxu0 0
  %72 = vmatpush2.bf16.msra.mxu0 0
  %73 = vmatprep.subr.bf16.mxu0 0
  %74 = vmatpush2.bf16.msra.mxu0 0
  %75 = vmatprep.subr.bf16.mxu0 0
  %76 = vmatpush2.bf16.msra.mxu0 0
  %77 = vmatprep.subr.bf16.mxu0 0
  %78 = vmatpush2.bf16.msra.mxu0 0
  %79 = vmatprep.mubr.bf16.mxu0 0
  %80 = vmatmul.mubr.bf16.gmra.mxu0 %v41
  %v81 = vpop.f32.mrf.mxu0
  %v82 = vadd.f32 %v37, %v81
  %v83 = vpop.f32.mrf.mxu0
  %v84 = vpop.f32.mrf.mxu0
  %v85 = vadd.f32 %v37, %v84
  %v86 = vpop.f32.mrf.mxu0
  %87 = vdwg.mxu0
  %v88 = vmax.f32 %v82, 0.0
  %v89 = vmax.f32 %v85, 0.0
  %v90 = vld [vmem:[%s3] sm:$0xff]
  %v91 = vld [vmem:[%s3 + $0x8] sm:$0xff]
  %v92 = vld [vmem:[%s3 + $0x10] sm:$0xff]
  %v93 = vld [vmem:[%s3 + $0x18] sm:$0xff]
  %v94 = vld [vmem:[%s4] sm:$0x1]
  %v95 = vpack.c.bf16 %v89, %v88
  %v96 = vpack.c.bf16 %v91, %v90
  %v97 = vpack.c.bf16 %v93, %v92
  %v99 = vlaneseq
  %v100 = vshrl.u32 %v99, 7
  %v101 = vsub.s32 0, %v100
  %v102 = vrot.slane %v94, %v101
  %vm104 = vcmask 261120
  %v106 = vsel %vm104, %v95, 0
  %108 = vmatprep.subr.bf16.mxu0 0
  %109 = vmatpush1.bf16.msra.mxu0 0
  %110 = vmatprep.subr.bf16.mxu0 0
  %111 = vmatpush1.bf16.msra.mxu0 0
  %112 = vmatprep.subr.bf16.mxu0 0
  %113 = vmatpush1.bf16.msra.mxu0 0
  %114 = vmatprep.subr.bf16.mxu0 0
  %115 = vmatpush1.bf16.msra.mxu0 0
  %116 = vmatprep.subr.bf16.mxu0 0
  %117 = vmatpush1.bf16.msra.mxu0 0
  %118 = vmatprep.subr.bf16.mxu0 0
  %119 = vmatpush1.bf16.msra.mxu0 0
  %120 = vmatprep.subr.bf16.mxu0 0
  %121 = vmatpush1.bf16.msra.mxu0 %v97
  %122 = vmatprep.subr.bf16.mxu0 0
  %123 = vmatpush1.bf16.msra.mxu0 %v96
  %124 = vmatprep.subr.bf16.mxu0 0
  %125 = vmatpush2.bf16.msra.mxu0 0
  %126 = vmatprep.subr.bf16.mxu0 0
  %127 = vmatpush2.bf16.msra.mxu0 0
  %128 = vmatprep.subr.bf16.mxu0 0
  %129 = vmatpush2.bf16.msra.mxu0 0
  %130 = vmatprep.subr.bf16.mxu0 0
  %131 = vmatpush2.bf16.msra.mxu0 0
  %132 = vmatprep.subr.bf16.mxu0 0
  %133 = vmatpush2.bf16.msra.mxu0 0
  %134 = vmatprep.subr.bf16.mxu0 0
  %135 = vmatpush2.bf16.msra.mxu0 0
  %136 = vmatprep.subr.bf16.mxu0 0
  %137 = vmatpush2.bf16.msra.mxu0 0
  %138 = vmatprep.subr.bf16.mxu0 0
  %139 = vmatpush2.bf16.msra.mxu0 0
  %140 = vmatprep.mubr.bf16.mxu0 0
  %141 = vmatmul.mubr.bf16.gmra.mxu0 %v106
  %v142 = vpop.f32.mrf.mxu0
  %v143 = vadd.f32 %v102, %v142
  %v144 = vpop.f32.mrf.mxu0
  %v145 = vpop.f32.mrf.mxu0
  %v146 = vadd.f32 %v102, %v145
  %v147 = vpop.f32.mrf.mxu0
  %148 = vdwg.mxu0
  %v149 = vmax.f32 %v143, 0.0
  %v150 = vmax.f32 %v146, 0.0
  %v151 = vld [vmem:[%s5] sm:$0xff]
  %v152 = vld [vmem:[%s5 + $0x8] sm:$0xff]
  %v153 = vld [vmem:[%s5 + $0x10] sm:$0xff]
  %v154 = vld [vmem:[%s5 + $0x18] sm:$0xff]
  %v155 = vld [vmem:[%s6] sm:$0x1]
  %v156 = vpack.c.bf16 %v150, %v149
  %v157 = vpack.c.bf16 %v152, %v151
  %v158 = vpack.c.bf16 %v154, %v153
  %v160 = vlaneseq
  %v161 = vshrl.u32 %v160, 7
  %v162 = vsub.s32 0, %v161
  %v163 = vrot.slane %v155, %v162
  %v166 = vsel %vm104, %v156, 0
  %168 = vmatprep.subr.bf16.mxu0 0
  %169 = vmatpush1.bf16.msra.mxu0 0
  %170 = vmatprep.subr.bf16.mxu0 0
  %171 = vmatpush1.bf16.msra.mxu0 0
  %172 = vmatprep.subr.bf16.mxu0 0
  %173 = vmatpush1.bf16.msra.mxu0 0
  %174 = vmatprep.subr.bf16.mxu0 0
  %175 = vmatpush1.bf16.msra.mxu0 0
  %176 = vmatprep.subr.bf16.mxu0 0
  %177 = vmatpush1.bf16.msra.mxu0 0
  %178 = vmatprep.subr.bf16.mxu0 0
  %179 = vmatpush1.bf16.msra.mxu0 0
  %180 = vmatprep.subr.bf16.mxu0 0
  %181 = vmatpush1.bf16.msra.mxu0 %v158
  %182 = vmatprep.subr.bf16.mxu0 0
  %183 = vmatpush1.bf16.msra.mxu0 %v157
  %184 = vmatprep.subr.bf16.mxu0 0
  %185 = vmatpush2.bf16.msra.mxu0 0
  %186 = vmatprep.subr.bf16.mxu0 0
  %187 = vmatpush2.bf16.msra.mxu0 0
  %188 = vmatprep.subr.bf16.mxu0 0
  %189 = vmatpush2.bf16.msra.mxu0 0
  %190 = vmatprep.subr.bf16.mxu0 0
  %191 = vmatpush2.bf16.msra.mxu0 0
  %192 = vmatprep.subr.bf16.mxu0 0
  %193 = vmatpush2.bf16.msra.mxu0 0
  %194 = vmatprep.subr.bf16.mxu0 0
  %195 = vmatpush2.bf16.msra.mxu0 0
  %196 = vmatprep.subr.bf16.mxu0 0
  %197 = vmatpush2.bf16.msra.mxu0 0
  %198 = vmatprep.subr.bf16.mxu0 0
  %199 = vmatpush2.bf16.msra.mxu0 0
  %200 = vmatprep.mubr.bf16.mxu0 0
  %201 = vmatmul.mubr.bf16.gmra.mxu0 %v166
  %v202 = vpop.f32.mrf.mxu0
  %v203 = vadd.f32 %v163, %v202
  %v204 = vpop.f32.mrf.mxu0
  %v205 = vpop.f32.mrf.mxu0
  %v206 = vadd.f32 %v163, %v205
  %v207 = vpop.f32.mrf.mxu0
  %208 = vdwg.mxu0
  %209 = vst.msk [vmem:[%s7] sm:$0xff] %vm104, %v203
  %210 = vst.msk [vmem:[%s7 + $0x8] sm:$0xff] %vm104, %v206
  // Predicated region
  $region30: #{_lambda_.5} parent=0 // pred_check
    _
  $region31: #{_lambda_.5} parent=0 // pred_check_branch
    %212 = sbr.rel (0) target = $region33
  $region32: #{_lambda_.5} parent=0 // pred_region
    _
  $region33: #{_lambda_.5} parent=0 // pred_fallthru
    _
  // Predicated region
  $region34: #{_lambda_.5} parent=0 // pred_check
    _
  $region35: #{_lambda_.5} parent=0 // pred_check_branch
    %214 = sbr.rel (0) target = $region37
  $region36: #{_lambda_.5} parent=0 // pred_region
    _
  $region37: #{_lambda_.5} parent=0 // pred_fallthru
    _

// kernel: _lambda_.8
$region0: #{_lambda_.8}
  #allocation0 [shape = 'u32[]', space=smem, size = 0x4, offset = 0x4, fixed_abs, tag = 'smem constant byte address 0x4 - core index']
  #allocation1 [shape = 'u32[144,128]{1,0:T(1,128)}', space=vmem, size = 0x12000, scoped, tag = 'internal scratch']
  %s0 = inlined_call_operand.vmem [shape: f32[12,4], index: 0, kind: input, shape index: {}]
  %s1 = inlined_call_operand.vmem [shape: f32[4,5], index: 1, kind: input, shape index: {}]
  %s2 = inlined_call_operand.vmem [shape: f32[1,5], index: 2, kind: input, shape index: {}]
  %s3 = inlined_call_operand.vmem [shape: f32[12,5], index: 3, kind: output, shape index: {}]
  %s4 = sld [smem:[#allocation0]]
  $region22: #{_lambda_.8} parent=0
    _
  %s6 = ssub.s32 1, %s4
  %s7 = scalar_select 0, %s6, %s4
  // Predicated region
  $region2: #{_lambda_.8} parent=0 // pred_check
    _
  $region3: #{_lambda_.8} parent=0 // pred_check_branch
    %9 = sbr.rel (0) target = $region5
  $region4: #{_lambda_.8} parent=0 // pred_region
    _
  $region5: #{_lambda_.8} parent=0 // pred_fallthru
    _
  // Predicated region
  $region6: #{_lambda_.8} parent=0 // pred_check
    _
  $region7: #{_lambda_.8} parent=0 // pred_check_branch
    %11 = sbr.rel (0) target = $region9
  $region8: #{_lambda_.8} parent=0 // pred_region
    _
  $region9: #{_lambda_.8} parent=0 // pred_fallthru
    _
  // Predicated region
  $region10: #{_lambda_.8} parent=0 // pred_check
    _
  $region11: #{_lambda_.8} parent=0 // pred_check_branch
    %13 = sbr.rel (0) target = $region13
  $region12: #{_lambda_.8} parent=0 // pred_region
    _
  $region13: #{_lambda_.8} parent=0 // pred_fallthru
    _
  %v15 = vld [vmem:[%s0] sm:$0xff]
  %v16 = vld [vmem:[%s0 + $0x8] sm:$0xf]
  %v17 = vld [vmem:[%s1] sm:$0xf]
  %v18 = vld [vmem:[%s2] sm:$0x1]
  %v19 = vpack.c.bf16 %v16, %v15
  %v20 = vpack.c.bf16 %v17, %v17
  %v22 = vlaneseq
  %v23 = vshrl.u32 %v22, 7
  %v24 = vsub.s32 0, %v23
  %v25 = vrot.slane %v18, %v24
  %vm27 = vcmask 31744
  %v29 = vsel %vm27, %v19, 0
  %vm31 = vcmask 1041408
  %v33 = vsel %vm31, %v20, 0
  %35 = vmatprep.subr.bf16.mxu0 0
  %36 = vmatpush1.bf16.msra.mxu0 0
  %37 = vmatprep.subr.bf16.mxu0 0
  %38 = vmatpush1.bf16.msra.mxu0 0
  %39 = vmatprep.subr.bf16.mxu0 0
  %40 = vmatpush1.bf16.msra.mxu0 0
  %41 = vmatprep.subr.bf16.mxu0 0
  %42 = vmatpush1.bf16.msra.mxu0 0
  %43 = vmatprep.subr.bf16.mxu0 0
  %44 = vmatpush1.bf16.msra.mxu0 0
  %45 = vmatprep.subr.bf16.mxu0 0
  %46 = vmatpush1.bf16.msra.mxu0 0
  %47 = vmatprep.subr.bf16.mxu0 0
  %48 = vmatpush1.bf16.msra.mxu0 0
  %49 = vmatprep.subr.bf16.mxu0 0
  %50 = vmatpush1.bf16.msra.mxu0 %v33
  %51 = vmatprep.subr.bf16.mxu0 0
  %52 = vmatpush2.bf16.msra.mxu0 0
  %53 = vmatprep.subr.bf16.mxu0 0
  %54 = vmatpush2.bf16.msra.mxu0 0
  %55 = vmatprep.subr.bf16.mxu0 0
  %56 = vmatpush2.bf16.msra.mxu0 0
  %57 = vmatprep.subr.bf16.mxu0 0
  %58 = vmatpush2.bf16.msra.mxu0 0
  %59 = vmatprep.subr.bf16.mxu0 0
  %60 = vmatpush2.bf16.msra.mxu0 0
  %61 = vmatprep.subr.bf16.mxu0 0
  %62 = vmatpush2.bf16.msra.mxu0 0
  %63 = vmatprep.subr.bf16.mxu0 0
  %64 = vmatpush2.bf16.msra.mxu0 0
  %65 = vmatprep.subr.bf16.mxu0 0
  %66 = vmatpush2.bf16.msra.mxu0 0
  %67 = vmatprep.mubr.bf16.mxu0 0
  %68 = vmatmul.mubr.bf16.gmra.mxu0 %v29
  %v69 = vpop.f32.mrf.mxu0
  %v70 = vadd.f32 %v25, %v69
  %v71 = vpop.f32.mrf.mxu0
  %v72 = vpop.f32.mrf.mxu0
  %v73 = vadd.f32 %v25, %v72
  %v74 = vpop.f32.mrf.mxu0
  %75 = vdwg.mxu0
  %vm76 = vcmask 39936
  %77 = vst.msk [vmem:[%s3] sm:$0xff] %vm76, %v70
  %vm78 = vcmask 35840
  %79 = vst.msk [vmem:[%s3 + $0x8] sm:$0xf] %vm78, %v73
  // Predicated region
  $region14: #{_lambda_.8} parent=0 // pred_check
    _
  $region15: #{_lambda_.8} parent=0 // pred_check_branch
    %81 = sbr.rel (0) target = $region17
  $region16: #{_lambda_.8} parent=0 // pred_region
    _
  $region17: #{_lambda_.8} parent=0 // pred_fallthru
    _
  // Predicated region
  $region18: #{_lambda_.8} parent=0 // pred_check
    _
  $region19: #{_lambda_.8} parent=0 // pred_check_branch
    %83 = sbr.rel (0) target = $region21
  $region20: #{_lambda_.8} parent=0 // pred_region
    _
  $region21: #{_lambda_.8} parent=0 // pred_fallthru
    _

// kernel: _lambda_.7
$region0: #{_lambda_.7}
  #allocation0 [shape = 'u32[]', space=smem, size = 0x4, offset = 0x4, fixed_abs, tag = 'smem constant byte address 0x4 - core index']
  #allocation1 [shape = 'u32[144,128]{1,0:T(1,128)}', space=vmem, size = 0x12000, scoped, tag = 'internal scratch']
  %s0 = inlined_call_operand.vmem [shape: f32[8,6], index: 0, kind: input, shape index: {}]
  %s1 = inlined_call_operand.vmem [shape: f32[6,18], index: 1, kind: input, shape index: {}]
  %s2 = inlined_call_operand.vmem [shape: f32[1,18], index: 2, kind: input, shape index: {}]
  %s3 = inlined_call_operand.vmem [shape: f32[6,6], index: 3, kind: input, shape index: {}]
  %s4 = inlined_call_operand.vmem [shape: f32[1,6], index: 4, kind: input, shape index: {}]
  %s5 = inlined_call_operand.vmem [shape: f32[6,32], index: 5, kind: input, shape index: {}]
  %s6 = inlined_call_operand.vmem [shape: f32[1,32], index: 6, kind: input, shape index: {}]
  %s7 = inlined_call_operand.vmem [shape: f32[32,6], index: 7, kind: input, shape index: {}]
  %s8 = inlined_call_operand.vmem [shape: f32[1,6], index: 8, kind: input, shape index: {}]
  %s9 = inlined_call_operand.vmem [shape: f32[1,6], index: 9, kind: input, shape index: {}, may-alias: {9,11}]
  %s10 = inlined_call_operand.vmem [shape: f32[1,6], index: 10, kind: input, shape index: {}, may-alias: {10,12}]
  %s11 = inlined_call_operand.vmem [shape: f32[1,6], index: 11, kind: input, shape index: {}, may-alias: {9,11}]
  %s12 = inlined_call_operand.vmem [shape: f32[1,6], index: 12, kind: input, shape index: {}, may-alias: {10,12}]
  %s13 = inlined_call_operand.vmem [shape: f32[8,6], index: 13, kind: output, shape index: {}]
  %s14 = sld [smem:[#allocation0]]
  $region62: #{_lambda_.7} parent=0
    _
  %s16 = ssub.s32 1, %s14
  %s17 = scalar_select 0, %s16, %s14
  // Predicated region
  $region2: #{_lambda_.7} parent=0 // pred_check
    _
  $region3: #{_lambda_.7} parent=0 // pred_check_branch
    %19 = sbr.rel (0) target = $region5
  $region4: #{_lambda_.7} parent=0 // pred_region
    _
  $region5: #{_lambda_.7} parent=0 // pred_fallthru
    _
  // Predicated region
  $region6: #{_lambda_.7} parent=0 // pred_check
    _
  $region7: #{_lambda_.7} parent=0 // pred_check_branch
    %21 = sbr.rel (0) target = $region9
  $region8: #{_lambda_.7} parent=0 // pred_region
    _
  $region9: #{_lambda_.7} parent=0 // pred_fallthru
    _
  // Predicated region
  $region10: #{_lambda_.7} parent=0 // pred_check
    _
  $region11: #{_lambda_.7} parent=0 // pred_check_branch
    %23 = sbr.rel (0) target = $region13
  $region12: #{_lambda_.7} parent=0 // pred_region
    _
  $region13: #{_lambda_.7} parent=0 // pred_fallthru
    _
  // Predicated region
  $region14: #{_lambda_.7} parent=0 // pred_check
    _
  $region15: #{_lambda_.7} parent=0 // pred_check_branch
    %25 = sbr.rel (0) target = $region17
  $region16: #{_lambda_.7} parent=0 // pred_region
    _
  $region17: #{_lambda_.7} parent=0 // pred_fallthru
    _
  // Predicated region
  $region18: #{_lambda_.7} parent=0 // pred_check
    _
  $region19: #{_lambda_.7} parent=0 // pred_check_branch
    %27 = sbr.rel (0) target = $region21
  $region20: #{_lambda_.7} parent=0 // pred_region
    _
  $region21: #{_lambda_.7} parent=0 // pred_fallthru
    _
  // Predicated region
  $region22: #{_lambda_.7} parent=0 // pred_check
    _
  $region23: #{_lambda_.7} parent=0 // pred_check_branch
    %29 = sbr.rel (0) target = $region25
  $region24: #{_lambda_.7} parent=0 // pred_region
    _
  $region25: #{_lambda_.7} parent=0 // pred_fallthru
    _
  // Predicated region
  $region26: #{_lambda_.7} parent=0 // pred_check
    _
  $region27: #{_lambda_.7} parent=0 // pred_check_branch
    %31 = sbr.rel (0) target = $region29
  $region28: #{_lambda_.7} parent=0 // pred_region
    _
  $region29: #{_lambda_.7} parent=0 // pred_fallthru
    _
  // Predicated region
  $region30: #{_lambda_.7} parent=0 // pred_check
    _
  $region31: #{_lambda_.7} parent=0 // pred_check_branch
    %33 = sbr.rel (0) target = $region33
  $region32: #{_lambda_.7} parent=0 // pred_region
    _
  $region33: #{_lambda_.7} parent=0 // pred_fallthru
    _
  // Predicated region
  $region34: #{_lambda_.7} parent=0 // pred_check
    _
  $region35: #{_lambda_.7} parent=0 // pred_check_branch
    %35 = sbr.rel (0) target = $region37
  $region36: #{_lambda_.7} parent=0 // pred_region
    _
  $region37: #{_lambda_.7} parent=0 // pred_fallthru
    _
  // Predicated region
  $region38: #{_lambda_.7} parent=0 // pred_check
    _
  $region39: #{_lambda_.7} parent=0 // pred_check_branch
    %37 = sbr.rel (0) target = $region41
  $region40: #{_lambda_.7} parent=0 // pred_region
    _
  $region41: #{_lambda_.7} parent=0 // pred_fallthru
    _
  // Predicated region
  $region42: #{_lambda_.7} parent=0 // pred_check
    _
  $region43: #{_lambda_.7} parent=0 // pred_check_branch
    %39 = sbr.rel (0) target = $region45
  $region44: #{_lambda_.7} parent=0 // pred_region
    _
  $region45: #{_lambda_.7} parent=0 // pred_fallthru
    _
  // Predicated region
  $region46: #{_lambda_.7} parent=0 // pred_check
    _
  $region47: #{_lambda_.7} parent=0 // pred_check_branch
    %41 = sbr.rel (0) target = $region49
  $region48: #{_lambda_.7} parent=0 // pred_region
    _
  $region49: #{_lambda_.7} parent=0 // pred_fallthru
    _
  // Predicated region
  $region50: #{_lambda_.7} parent=0 // pred_check
    _
  $region51: #{_lambda_.7} parent=0 // pred_check_branch
    %43 = sbr.rel (0) target = $region53
  $region52: #{_lambda_.7} parent=0 // pred_region
    _
  $region53: #{_lambda_.7} parent=0 // pred_fallthru
    _
  %v45 = vld [vmem:[%s0] sm:$0xff]
  %v46 = vpack.c.bf16 %v45, %v45
  %v47 = vld [vmem:[%s1] sm:$0x3f]
  %v48 = vpack.c.bf16 %v47, %v47
  %v49 = vld [vmem:[%s2] sm:$0x1]
  %v51 = vlaneseq
  %v52 = vshrl.u32 %v51, 7
  %v53 = vsub.s32 0, %v52
  %v54 = vrot.slane %v49, %v53
  %vm56 = vcmask 48128
  %v58 = vsel %vm56, %v46, 0
  %vm60 = vcmask 1042432
  %v62 = vsel %vm60, %v48, 0
  %64 = vmatprep.subr.bf16.mxu0 0
  %65 = vmatpush1.bf16.msra.mxu0 0
  %66 = vmatprep.subr.bf16.mxu0 0
  %67 = vmatpush1.bf16.msra.mxu0 0
  %68 = vmatprep.subr.bf16.mxu0 0
  %69 = vmatpush1.bf16.msra.mxu0 0
  %70 = vmatprep.subr.bf16.mxu0 0
  %71 = vmatpush1.bf16.msra.mxu0 0
  %72 = vmatprep.subr.bf16.mxu0 0
  %73 = vmatpush1.bf16.msra.mxu0 0
  %74 = vmatprep.subr.bf16.mxu0 0
  %75 = vmatpush1.bf16.msra.mxu0 0
  %76 = vmatprep.subr.bf16.mxu0 0
  %77 = vmatpush1.bf16.msra.mxu0 0
  %78 = vmatprep.subr.bf16.mxu0 0
  %79 = vmatpush1.bf16.msra.mxu0 %v62
  %80 = vmatprep.subr.bf16.mxu0 0
  %81 = vmatpush2.bf16.msra.mxu0 0
  %82 = vmatprep.subr.bf16.mxu0 0
  %83 = vmatpush2.bf16.msra.mxu0 0
  %84 = vmatprep.subr.bf16.mxu0 0
  %85 = vmatpush2.bf16.msra.mxu0 0
  %86 = vmatprep.subr.bf16.mxu0 0
  %87 = vmatpush2.bf16.msra.mxu0 0
  %88 = vmatprep.subr.bf16.mxu0 0
  %89 = vmatpush2.bf16.msra.mxu0 0
  %90 = vmatprep.subr.bf16.mxu0 0
  %91 = vmatpush2.bf16.msra.mxu0 0
  %92 = vmatprep.subr.bf16.mxu0 0
  %93 = vmatpush2.bf16.msra.mxu0 0
  %94 = vmatprep.subr.bf16.mxu0 0
  %95 = vmatpush2.bf16.msra.mxu0 0
  %96 = vmatprep.mubr.bf16.mxu0 0
  %97 = vmatmul.mubr.bf16.gmra.mxu0 %v58
  %v98 = vpop.f32.mrf.mxu0
  %v99 = vadd.f32 %v54, %v98
  %v100 = vpop.f32.mrf.mxu0
  %v101 = vpop.f32.mrf.mxu0
  %v102 = vpop.f32.mrf.mxu0
  %103 = vdwg.mxu0
  %v104 = vlaneseq
  %v105 = vshrl.u32 %v104, 7
  %v106 = vlaneseq
  %v107 = vand.u32 %v106, 127
  %vm108 = vcmp.lt.s32.totalorder %v105, 0
  %v109 = vsub.s32 0, %v105
  %v110 = vsel %vm108, %v109, %v105
  %v111 = vshrl.u32 %v110, 2
  %v112 = vand.u32 %v110, 3
  %v113 = vsub.s32 0, %v112
  %v114 = vsel %vm108, %v113, %v112
  %vm115 = vcmp.ne.s32.totalorder %v114, 0
  %vm116 = vcmp.lt.s32.totalorder %v114, 0
  %vm117 = vmand %vm116, %vm115
  %v118 = vadd.s32 %v114, 4
  %v119 = vsel %vm117, %v118, %v114
  %vm120 = vcmp.lt.s32.totalorder %v107, 0
  %v121 = vsub.s32 0, %v107
  %v122 = vsel %vm120, %v121, %v107
  %v123 = vshrl.u32 %v122, 2
  %v124 = vand.u32 %v122, 3
  %v125 = vsub.s32 0, %v124
  %v126 = vsel %vm120, %v125, %v124
  %vm127 = vcmp.ne.s32.totalorder %v126, 0
  %vm128 = vcmp.lt.s32.totalorder %v126, 0
  %vm129 = vmand %vm128, %vm127
  %v130 = vadd.s32 %v126, 4
  %v131 = vsel %vm129, %v130, %v126
  %vm132 = vcmp.eq.s32.totalorder %v119, %v131
  %v133 = vmul.f32 %v99, 0.57735026
  %v134 = vpack.c.bf16 %v133, %v133
  %v135 = vpack.c.bf16 %v99, %v99
  %137 = vrot.lane.b32.xlu0 %v135, 122
  %v138 = vpop.permute.xlu0 %137
  %vm139 = vcmask 23552
  %v141 = vsel %vm139, %v134, 0
  %v144 = vsel %vm139, %v138, 0
  %146 = vmatprep.subr.bf16.mxu0 0
  %147 = vmatpush1.bf16.xpose.msra.mxu0 0
  %148 = vmatprep.subr.bf16.mxu0 0
  %149 = vmatpush1.bf16.xpose.msra.mxu0 0
  %150 = vmatprep.subr.bf16.mxu0 0
  %151 = vmatpush1.bf16.xpose.msra.mxu0 0
  %152 = vmatprep.subr.bf16.mxu0 0
  %153 = vmatpush1.bf16.xpose.msra.mxu0 0
  %154 = vmatprep.subr.bf16.mxu0 0
  %155 = vmatpush1.bf16.xpose.msra.mxu0 0
  %156 = vmatprep.subr.bf16.mxu0 0
  %157 = vmatpush1.bf16.xpose.msra.mxu0 0
  %158 = vmatprep.subr.bf16.mxu0 0
  %159 = vmatpush1.bf16.xpose.msra.mxu0 0
  %160 = vmatprep.subr.bf16.mxu0 0
  %161 = vmatpush1.bf16.xpose.msra.mxu0 %v144
  %162 = vmatprep.subr.bf16.mxu0 0
  %163 = vmatpush2.bf16.xpose.msra.mxu0 0
  %164 = vmatprep.subr.bf16.mxu0 0
  %165 = vmatpush2.bf16.xpose.msra.mxu0 0
  %166 = vmatprep.subr.bf16.mxu0 0
  %167 = vmatpush2.bf16.xpose.msra.mxu0 0
  %168 = vmatprep.subr.bf16.mxu0 0
  %169 = vmatpush2.bf16.xpose.msra.mxu0 0
  %170 = vmatprep.subr.bf16.mxu0 0
  %171 = vmatpush2.bf16.xpose.msra.mxu0 0
  %172 = vmatprep.subr.bf16.mxu0 0
  %173 = vmatpush2.bf16.xpose.msra.mxu0 0
  %174 = vmatprep.subr.bf16.mxu0 0
  %175 = vmatpush2.bf16.xpose.msra.mxu0 0
  %176 = vmatprep.subr.bf16.mxu0 0
  %177 = vmatpush2.bf16.xpose.msra.mxu0 0
  %178 = vmatprep.mubr.bf16.mxu0 0
  %179 = vmatmul.mubr.bf16.gmra.mxu0 %v141
  %v180 = vpop.f32.mrf.mxu0
  %v181 = vadd.f32 0.0, %v180
  %v182 = vpop.f32.mrf.mxu0
  %v183 = vpop.f32.mrf.mxu0
  %v184 = vpop.f32.mrf.mxu0
  %185 = vdwg.mxu0
  %v186 = vsel %vm132, %v181, -1e+30
  %vm187 = vcmask 64512
  %v188 = vsel %vm187, %v186, -inf
  %189 = vmax.xlane.f32.xlu0 %v188
  %v190 = vpop.xlane.xlu0 %189
  %v191 = vsub.f32 %v186, %v190
  %v192 = vmul.f32 %v191, 1.442695
  %v193 = vpow.pop %v192
  %v194 = vsel %vm187, %v193, 0.0
  %195 = vadd.xlane.f32.xlu0 %v194
  %v196 = vpop.xlane.xlu0 %195
  %v197 = vrcp.pop %v196
  %v198 = vmul.f32 %v193, %v197
  %v199 = vpack.c.bf16 %v198, %v198
  %200 = vrot.lane.b32.xlu0 %v135, 116
  %v201 = vpop.permute.xlu0 %200
  %v203 = vsel %vm187, %v199, 0
  %vm205 = vcmask 1043456
  %v207 = vsel %vm205, %v201, 0
  %209 = vmatprep.subr.bf16.mxu0 0
  %210 = vmatpush1.bf16.msra.mxu0 0
  %211 = vmatprep.subr.bf16.mxu0 0
  %212 = vmatpush1.bf16.msra.mxu0 0
  %213 = vmatprep.subr.bf16.mxu0 0
  %214 = vmatpush1.bf16.msra.mxu0 0
  %215 = vmatprep.subr.bf16.mxu0 0
  %216 = vmatpush1.bf16.msra.mxu0 0
  %217 = vmatprep.subr.bf16.mxu0 0
  %218 = vmatpush1.bf16.msra.mxu0 0
  %219 = vmatprep.subr.bf16.mxu0 0
  %220 = vmatpush1.bf16.msra.mxu0 0
  %221 = vmatprep.subr.bf16.mxu0 0
  %222 = vmatpush1.bf16.msra.mxu0 0
  %223 = vmatprep.subr.bf16.mxu0 0
  %224 = vmatpush1.bf16.msra.mxu0 %v207
  %225 = vmatprep.subr.bf16.mxu0 0
  %226 = vmatpush2.bf16.msra.mxu0 0
  %227 = vmatprep.subr.bf16.mxu0 0
  %228 = vmatpush2.bf16.msra.mxu0 0
  %229 = vmatprep.subr.bf16.mxu0 0
  %230 = vmatpush2.bf16.msra.mxu0 0
  %231 = vmatprep.subr.bf16.mxu0 0
  %232 = vmatpush2.bf16.msra.mxu0 0
  %233 = vmatprep.subr.bf16.mxu0 0
  %234 = vmatpush2.bf16.msra.mxu0 0
  %235 = vmatprep.subr.bf16.mxu0 0
  %236 = vmatpush2.bf16.msra.mxu0 0
  %237 = vmatprep.subr.bf16.mxu0 0
  %238 = vmatpush2.bf16.msra.mxu0 0
  %239 = vmatprep.subr.bf16.mxu0 0
  %240 = vmatpush2.bf16.msra.mxu0 0
  %241 = vmatprep.mubr.bf16.mxu0 0
  %242 = vmatmul.mubr.bf16.gmra.mxu0 %v203
  %v243 = vpop.f32.mrf.mxu0
  %v244 = vadd.f32 0.0, %v243
  %v245 = vpop.f32.mrf.mxu0
  %v246 = vpop.f32.mrf.mxu0
  %v247 = vpop.f32.mrf.mxu0
  %248 = vdwg.mxu0
  %250 = vrot.lane.b32.xlu0 %v134, 125
  %v251 = vpop.permute.xlu0 %250
  %252 = vrot.lane.b32.xlu0 %v135, 119
  %v253 = vpop.permute.xlu0 %252
  %v255 = vsel %vm139, %v251, 0
  %v258 = vsel %vm139, %v253, 0
  %260 = vmatprep.subr.bf16.mxu0 0
  %261 = vmatpush1.bf16.xpose.msra.mxu0 0
  %262 = vmatprep.subr.bf16.mxu0 0
  %263 = vmatpush1.bf16.xpose.msra.mxu0 0
  %264 = vmatprep.subr.bf16.mxu0 0
  %265 = vmatpush1.bf16.xpose.msra.mxu0 0
  %266 = vmatprep.subr.bf16.mxu0 0
  %267 = vmatpush1.bf16.xpose.msra.mxu0 0
  %268 = vmatprep.subr.bf16.mxu0 0
  %269 = vmatpush1.bf16.xpose.msra.mxu0 0
  %270 = vmatprep.subr.bf16.mxu0 0
  %271 = vmatpush1.bf16.xpose.msra.mxu0 0
  %272 = vmatprep.subr.bf16.mxu0 0
  %273 = vmatpush1.bf16.xpose.msra.mxu0 0
  %274 = vmatprep.subr.bf16.mxu0 0
  %275 = vmatpush1.bf16.xpose.msra.mxu0 %v258
  %276 = vmatprep.subr.bf16.mxu0 0
  %277 = vmatpush2.bf16.xpose.msra.mxu0 0
  %278 = vmatprep.subr.bf16.mxu0 0
  %279 = vmatpush2.bf16.xpose.msra.mxu0 0
  %280 = vmatprep.subr.bf16.mxu0 0
  %281 = vmatpush2.bf16.xpose.msra.mxu0 0
  %282 = vmatprep.subr.bf16.mxu0 0
  %283 = vmatpush2.bf16.xpose.msra.mxu0 0
  %284 = vmatprep.subr.bf16.mxu0 0
  %285 = vmatpush2.bf16.xpose.msra.mxu0 0
  %286 = vmatprep.subr.bf16.mxu0 0
  %287 = vmatpush2.bf16.xpose.msra.mxu0 0
  %288 = vmatprep.subr.bf16.mxu0 0
  %289 = vmatpush2.bf16.xpose.msra.mxu0 0
  %290 = vmatprep.subr.bf16.mxu0 0
  %291 = vmatpush2.bf16.xpose.msra.mxu0 0
  %292 = vmatprep.mubr.bf16.mxu0 0
  %293 = vmatmul.mubr.bf16.gmra.mxu0 %v255
  %v294 = vpop.f32.mrf.mxu0
  %v295 = vadd.f32 0.0, %v294
  %v296 = vpop.f32.mrf.mxu0
  %v297 = vpop.f32.mrf.mxu0
  %v298 = vpop.f32.mrf.mxu0
  %299 = vdwg.mxu0
  %v300 = vsel %vm132, %v295, -1e+30
  %v301 = vsel %vm187, %v300, -inf
  %302 = vmax.xlane.f32.xlu0 %v301
  %v303 = vpop.xlane.xlu0 %302
  %v304 = vsub.f32 %v300, %v303
  %v305 = vmul.f32 %v304, 1.442695
  %v306 = vpow.pop %v305
  %v307 = vsel %vm187, %v306, 0.0
  %308 = vadd.xlane.f32.xlu0 %v307
  %v309 = vpop.xlane.xlu0 %308
  %v310 = vrcp.pop %v309
  %v311 = vmul.f32 %v306, %v310
  %v312 = vpack.c.bf16 %v311, %v311
  %313 = vrot.lane.b32.xlu0 %v135, 113
  %v314 = vpop.permute.xlu0 %313
  %v316 = vsel %vm187, %v312, 0
  %v319 = vsel %vm205, %v314, 0
  %321 = vmatprep.subr.bf16.mxu0 0
  %322 = vmatpush1.bf16.msra.mxu0 0
  %323 = vmatprep.subr.bf16.mxu0 0
  %324 = vmatpush1.bf16.msra.mxu0 0
  %325 = vmatprep.subr.bf16.mxu0 0
  %326 = vmatpush1.bf16.msra.mxu0 0
  %327 = vmatprep.subr.bf16.mxu0 0
  %328 = vmatpush1.bf16.msra.mxu0 0
  %329 = vmatprep.subr.bf16.mxu0 0
  %330 = vmatpush1.bf16.msra.mxu0 0
  %331 = vmatprep.subr.bf16.mxu0 0
  %332 = vmatpush1.bf16.msra.mxu0 0
  %333 = vmatprep.subr.bf16.mxu0 0
  %334 = vmatpush1.bf16.msra.mxu0 0
  %335 = vmatprep.subr.bf16.mxu0 0
  %336 = vmatpush1.bf16.msra.mxu0 %v319
  %337 = vmatprep.subr.bf16.mxu0 0
  %338 = vmatpush2.bf16.msra.mxu0 0
  %339 = vmatprep.subr.bf16.mxu0 0
  %340 = vmatpush2.bf16.msra.mxu0 0
  %341 = vmatprep.subr.bf16.mxu0 0
  %342 = vmatpush2.bf16.msra.mxu0 0
  %343 = vmatprep.subr.bf16.mxu0 0
  %344 = vmatpush2.bf16.msra.mxu0 0
  %345 = vmatprep.subr.bf16.mxu0 0
  %346 = vmatpush2.bf16.msra.mxu0 0
  %347 = vmatprep.subr.bf16.mxu0 0
  %348 = vmatpush2.bf16.msra.mxu0 0
  %349 = vmatprep.subr.bf16.mxu0 0
  %350 = vmatpush2.bf16.msra.mxu0 0
  %351 = vmatprep.subr.bf16.mxu0 0
  %352 = vmatpush2.bf16.msra.mxu0 0
  %353 = vmatprep.mubr.bf16.mxu0 0
  %354 = vmatmul.mubr.bf16.gmra.mxu0 %v316
  %v355 = vpop.f32.mrf.mxu0
  %v356 = vadd.f32 0.0, %v355
  %v357 = vpop.f32.mrf.mxu0
  %v358 = vpop.f32.mrf.mxu0
  %v359 = vpop.f32.mrf.mxu0
  %360 = vdwg.mxu0
  %362 = vrot.lane.b32.xlu0 %v356, 3
  %v363 = vpop.permute.xlu0 %362
  %v365 = vsel %vm139, %v244, %v363
  %v366 = vpack.c.bf16 %v365, %v365
  %v367 = vld [vmem:[%s3] sm:$0x3f]
  %v368 = vpack.c.bf16 %v367, %v367
  %v369 = vld [vmem:[%s4] sm:$0x1]
  %v371 = vlaneseq
  %v372 = vshrl.u32 %v371, 7
  %v373 = vsub.s32 0, %v372
  %v374 = vrot.slane %v369, %v373
  %v377 = vsel %vm56, %v366, 0
  %v380 = vsel %vm60, %v368, 0
  %382 = vmatprep.subr.bf16.mxu0 0
  %383 = vmatpush1.bf16.msra.mxu0 0
  %384 = vmatprep.subr.bf16.mxu0 0
  %385 = vmatpush1.bf16.msra.mxu0 0
  %386 = vmatprep.subr.bf16.mxu0 0
  %387 = vmatpush1.bf16.msra.mxu0 0
  %388 = vmatprep.subr.bf16.mxu0 0
  %389 = vmatpush1.bf16.msra.mxu0 0
  %390 = vmatprep.subr.bf16.mxu0 0
  %391 = vmatpush1.bf16.msra.mxu0 0
  %392 = vmatprep.subr.bf16.mxu0 0
  %393 = vmatpush1.bf16.msra.mxu0 0
  %394 = vmatprep.subr.bf16.mxu0 0
  %395 = vmatpush1.bf16.msra.mxu0 0
  %396 = vmatprep.subr.bf16.mxu0 0
  %397 = vmatpush1.bf16.msra.mxu0 %v380
  %398 = vmatprep.subr.bf16.mxu0 0
  %399 = vmatpush2.bf16.msra.mxu0 0
  %400 = vmatprep.subr.bf16.mxu0 0
  %401 = vmatpush2.bf16.msra.mxu0 0
  %402 = vmatprep.subr.bf16.mxu0 0
  %403 = vmatpush2.bf16.msra.mxu0 0
  %404 = vmatprep.subr.bf16.mxu0 0
  %405 = vmatpush2.bf16.msra.mxu0 0
  %406 = vmatprep.subr.bf16.mxu0 0
  %407 = vmatpush2.bf16.msra.mxu0 0
  %408 = vmatprep.subr.bf16.mxu0 0
  %409 = vmatpush2.bf16.msra.mxu0 0
  %410 = vmatprep.subr.bf16.mxu0 0
  %411 = vmatpush2.bf16.msra.mxu0 0
  %412 = vmatprep.subr.bf16.mxu0 0
  %413 = vmatpush2.bf16.msra.mxu0 0
  %414 = vmatprep.mubr.bf16.mxu0 0
  %415 = vmatmul.mubr.bf16.gmra.mxu0 %v377
  %v416 = vpop.f32.mrf.mxu0
  %v417 = vadd.f32 %v374, %v416
  %v418 = vpop.f32.mrf.mxu0
  %v419 = vpop.f32.mrf.mxu0
  %v420 = vpop.f32.mrf.mxu0
  %421 = vdwg.mxu0
  %v422 = vadd.f32 %v45, %v417
  %v423 = vld [vmem:[%s9] sm:$0x1]
  %v424 = vld [vmem:[%s10] sm:$0x1]
  %v425 = vsel %vm56, %v422, 0.0
  %426 = vadd.xlane.f32.xlu0 %v425
  %v427 = vpop.xlane.xlu0 %426
  %v428 = vrcp.pop 6.0
  %v429 = vmul.f32 %v427, %v428
  %v430 = vsub.f32 %v422, %v429
  %v431 = vmul.f32 %v430, %v430
  %v432 = vsel %vm56, %v431, 0.0
  %433 = vadd.xlane.f32.xlu0 %v432
  %v434 = vpop.xlane.xlu0 %433
  %v435 = vmul.f32 %v434, %v428
  %v436 = vadd.f32 %v435, 1e-05
  %v437 = vrsqrt.pop %v436
  %v438 = vmul.f32 %v430, %v437
  %v440 = vlaneseq
  %v441 = vshrl.u32 %v440, 7
  %v442 = vsub.s32 0, %v441
  %v443 = vrot.slane %v423, %v442
  %v445 = vmul.f32 %v438, %v443
  %v447 = vlaneseq
  %v448 = vshrl.u32 %v447, 7
  %v449 = vsub.s32 0, %v448
  %v450 = vrot.slane %v424, %v449
  %v452 = vadd.f32 %v445, %v450
  %v453 = vpack.c.bf16 %v452, %v452
  %v454 = vld [vmem:[%s5] sm:$0x3f]
  %v455 = vpack.c.bf16 %v454, %v454
  %v456 = vld [vmem:[%s6] sm:$0x1]
  %v458 = vlaneseq
  %v459 = vshrl.u32 %v458, 7
  %v460 = vsub.s32 0, %v459
  %v461 = vrot.slane %v456, %v460
  %v464 = vsel %vm56, %v453, 0
  %v467 = vsel %vm60, %v455, 0
  %469 = vmatprep.subr.bf16.mxu0 0
  %470 = vmatpush1.bf16.msra.mxu0 0
  %471 = vmatprep.subr.bf16.mxu0 0
  %472 = vmatpush1.bf16.msra.mxu0 0
  %473 = vmatprep.subr.bf16.mxu0 0
  %474 = vmatpush1.bf16.msra.mxu0 0
  %475 = vmatprep.subr.bf16.mxu0 0
  %476 = vmatpush1.bf16.msra.mxu0 0
  %477 = vmatprep.subr.bf16.mxu0 0
  %478 = vmatpush1.bf16.msra.mxu0 0
  %479 = vmatprep.subr.bf16.mxu0 0
  %480 = vmatpush1.bf16.msra.mxu0 0
  %481 = vmatprep.subr.bf16.mxu0 0
  %482 = vmatpush1.bf16.msra.mxu0 0
  %483 = vmatprep.subr.bf16.mxu0 0
  %484 = vmatpush1.bf16.msra.mxu0 %v467
  %485 = vmatprep.subr.bf16.mxu0 0
  %486 = vmatpush2.bf16.msra.mxu0 0
  %487 = vmatprep.subr.bf16.mxu0 0
  %488 = vmatpush2.bf16.msra.mxu0 0
  %489 = vmatprep.subr.bf16.mxu0 0
  %490 = vmatpush2.bf16.msra.mxu0 0
  %491 = vmatprep.subr.bf16.mxu0 0
  %492 = vmatpush2.bf16.msra.mxu0 0
  %493 = vmatprep.subr.bf16.mxu0 0
  %494 = vmatpush2.bf16.msra.mxu0 0
  %495 = vmatprep.subr.bf16.mxu0 0
  %496 = vmatpush2.bf16.msra.mxu0 0
  %497 = vmatprep.subr.bf16.mxu0 0
  %498 = vmatpush2.bf16.msra.mxu0 0
  %499 = vmatprep.subr.bf16.mxu0 0
  %500 = vmatpush2.bf16.msra.mxu0 0
  %501 = vmatprep.mubr.bf16.mxu0 0
  %502 = vmatmul.mubr.bf16.gmra.mxu0 %v464
  %v503 = vpop.f32.mrf.mxu0
  %v504 = vadd.f32 %v461, %v503
  %v505 = vpop.f32.mrf.mxu0
  %v506 = vpop.f32.mrf.mxu0
  %v507 = vpop.f32.mrf.mxu0
  %508 = vdwg.mxu0
  %v509 = vmax.f32 %v504, 0.0
  %v510 = vpack.c.bf16 %v509, %v509
  %v511 = vld [vmem:[%s7] sm:$0xff]
  %v512 = vld [vmem:[%s7 + $0x8] sm:$0xff]
  %v513 = vld [vmem:[%s7 + $0x10] sm:$0xff]
  %v514 = vld [vmem:[%s7 + $0x18] sm:$0xff]
  %v515 = vpack.c.bf16 %v512, %v511
  %v516 = vpack.c.bf16 %v514, %v513
  %v517 = vld [vmem:[%s8] sm:$0x1]
  %v519 = vlaneseq
  %v520 = vshrl.u32 %v519, 7
  %v521 = vsub.s32 0, %v520
  %v522 = vrot.slane %v517, %v521
  %vm524 = vcmask 261120
  %v526 = vsel %vm524, %v510, 0
  %528 = vmatprep.subr.bf16.mxu0 0
  %529 = vmatpush1.bf16.msra.mxu0 0
  %530 = vmatprep.subr.bf16.mxu0 0
  %531 = vmatpush1.bf16.msra.mxu0 0
  %532 = vmatprep.subr.bf16.mxu0 0
  %533 = vmatpush1.bf16.msra.mxu0 0
  %534 = vmatprep.subr.bf16.mxu0 0
  %535 = vmatpush1.bf16.msra.mxu0 0
  %536 = vmatprep.subr.bf16.mxu0 0
  %537 = vmatpush1.bf16.msra.mxu0 0
  %538 = vmatprep.subr.bf16.mxu0 0
  %539 = vmatpush1.bf16.msra.mxu0 0
  %540 = vmatprep.subr.bf16.mxu0 0
  %541 = vmatpush1.bf16.msra.mxu0 %v516
  %542 = vmatprep.subr.bf16.mxu0 0
  %543 = vmatpush1.bf16.msra.mxu0 %v515
  %544 = vmatprep.subr.bf16.mxu0 0
  %545 = vmatpush2.bf16.msra.mxu0 0
  %546 = vmatprep.subr.bf16.mxu0 0
  %547 = vmatpush2.bf16.msra.mxu0 0
  %548 = vmatprep.subr.bf16.mxu0 0
  %549 = vmatpush2.bf16.msra.mxu0 0
  %550 = vmatprep.subr.bf16.mxu0 0
  %551 = vmatpush2.bf16.msra.mxu0 0
  %552 = vmatprep.subr.bf16.mxu0 0
  %553 = vmatpush2.bf16.msra.mxu0 0
  %554 = vmatprep.subr.bf16.mxu0 0
  %555 = vmatpush2.bf16.msra.mxu0 0
  %556 = vmatprep.subr.bf16.mxu0 0
  %557 = vmatpush2.bf16.msra.mxu0 0
  %558 = vmatprep.subr.bf16.mxu0 0
  %559 = vmatpush2.bf16.msra.mxu0 0
  %560 = vmatprep.mubr.bf16.mxu0 0
  %561 = vmatmul.mubr.bf16.gmra.mxu0 %v526
  %v562 = vpop.f32.mrf.mxu0
  %v563 = vadd.f32 %v522, %v562
  %v564 = vpop.f32.mrf.mxu0
  %v565 = vpop.f32.mrf.mxu0
  %v566 = vpop.f32.mrf.mxu0
  %567 = vdwg.mxu0
  %v568 = vadd.f32 %v452, %v563
  %v569 = vld [vmem:[%s11] sm:$0x1]
  %v570 = vld [vmem:[%s12] sm:$0x1]
  %v571 = vsel %vm56, %v568, 0.0
  %572 = vadd.xlane.f32.xlu0 %v571
  %v573 = vpop.xlane.xlu0 %572
  %v574 = vmul.f32 %v573, %v428
  %v575 = vsub.f32 %v568, %v574
  %v576 = vmul.f32 %v575, %v575
  %v577 = vsel %vm56, %v576, 0.0
  %578 = vadd.xlane.f32.xlu0 %v577
  %v579 = vpop.xlane.xlu0 %578
  %v580 = vmul.f32 %v579, %v428
  %v581 = vadd.f32 %v580, 1e-05
  %v582 = vrsqrt.pop %v581
  %v583 = vmul.f32 %v575, %v582
  %v585 = vlaneseq
  %v586 = vshrl.u32 %v585, 7
  %v587 = vsub.s32 0, %v586
  %v588 = vrot.slane %v569, %v587
  %v590 = vmul.f32 %v583, %v588
  %v592 = vlaneseq
  %v593 = vshrl.u32 %v592, 7
  %v594 = vsub.s32 0, %v593
  %v595 = vrot.slane %v570, %v594
  %v597 = vadd.f32 %v590, %v595
  %598 = vst.msk [vmem:[%s13] sm:$0xff] %vm56, %v597
  // Predicated region
  $region54: #{_lambda_.7} parent=0 // pred_check
    _
  $region55: #{_lambda_.7} parent=0 // pred_check_branch
    %600 = sbr.rel (0) target = $region57
  $region56: #{_lambda_.7} parent=0 // pred_region
    _
  $region57: #{_lambda_.7} parent=0 // pred_fallthru
    _
  // Predicated region
  $region58: #{_lambda_.7} parent=0 // pred_check
    _
  $region59: #{_lambda_.7} parent=0 // pred_check_branch
    %602 = sbr.rel (0) target = $region61
  $region60: #{_lambda_.7} parent=0 // pred_region
    _
  $region61: #{_lambda_.7} parent=0 // pred_fallthru
    _

// kernel: _lambda_.9
$region0: #{_lambda_.9}
  #allocation0 [shape = 'u32[]', space=smem, size = 0x4, offset = 0x4, fixed_abs, tag = 'smem constant byte address 0x4 - core index']
  #allocation1 [shape = 'u32[144,128]{1,0:T(1,128)}', space=vmem, size = 0x12000, scoped, tag = 'internal scratch']
  %s0 = inlined_call_operand.vmem [shape: f32[32,6], index: 0, kind: input, shape index: {}]
  %s1 = inlined_call_operand.vmem [shape: f32[6,32], index: 1, kind: input, shape index: {}]
  %s2 = inlined_call_operand.vmem [shape: f32[1,32], index: 2, kind: input, shape index: {}]
  %s3 = inlined_call_operand.vmem [shape: f32[32,32], index: 3, kind: input, shape index: {}]
  %s4 = inlined_call_operand.vmem [shape: f32[1,32], index: 4, kind: input, shape index: {}]
  %s5 = inlined_call_operand.vmem [shape: f32[32,4], index: 5, kind: input, shape index: {}]
  %s6 = inlined_call_operand.vmem [shape: f32[1,4], index: 6, kind: input, shape index: {}]
  %s7 = inlined_call_operand.vmem [shape: f32[32,4], index: 7, kind: output, shape index: {}]
  %s8 = sld [smem:[#allocation0]]
  $region38: #{_lambda_.9} parent=0
    _
  %s10 = ssub.s32 1, %s8
  %s11 = scalar_select 0, %s10, %s8
  // Predicated region
  $region2: #{_lambda_.9} parent=0 // pred_check
    _
  $region3: #{_lambda_.9} parent=0 // pred_check_branch
    %13 = sbr.rel (0) target = $region5
  $region4: #{_lambda_.9} parent=0 // pred_region
    _
  $region5: #{_lambda_.9} parent=0 // pred_fallthru
    _
  // Predicated region
  $region6: #{_lambda_.9} parent=0 // pred_check
    _
  $region7: #{_lambda_.9} parent=0 // pred_check_branch
    %15 = sbr.rel (0) target = $region9
  $region8: #{_lambda_.9} parent=0 // pred_region
    _
  $region9: #{_lambda_.9} parent=0 // pred_fallthru
    _
  // Predicated region
  $region10: #{_lambda_.9} parent=0 // pred_check
    _
  $region11: #{_lambda_.9} parent=0 // pred_check_branch
    %17 = sbr.rel (0) target = $region13
  $region12: #{_lambda_.9} parent=0 // pred_region
    _
  $region13: #{_lambda_.9} parent=0 // pred_fallthru
    _
  // Predicated region
  $region14: #{_lambda_.9} parent=0 // pred_check
    _
  $region15: #{_lambda_.9} parent=0 // pred_check_branch
    %19 = sbr.rel (0) target = $region17
  $region16: #{_lambda_.9} parent=0 // pred_region
    _
  $region17: #{_lambda_.9} parent=0 // pred_fallthru
    _
  // Predicated region
  $region18: #{_lambda_.9} parent=0 // pred_check
    _
  $region19: #{_lambda_.9} parent=0 // pred_check_branch
    %21 = sbr.rel (0) target = $region21
  $region20: #{_lambda_.9} parent=0 // pred_region
    _
  $region21: #{_lambda_.9} parent=0 // pred_fallthru
    _
  // Predicated region
  $region22: #{_lambda_.9} parent=0 // pred_check
    _
  $region23: #{_lambda_.9} parent=0 // pred_check_branch
    %23 = sbr.rel (0) target = $region25
  $region24: #{_lambda_.9} parent=0 // pred_region
    _
  $region25: #{_lambda_.9} parent=0 // pred_fallthru
    _
  // Predicated region
  $region26: #{_lambda_.9} parent=0 // pred_check
    _
  $region27: #{_lambda_.9} parent=0 // pred_check_branch
    %25 = sbr.rel (0) target = $region29
  $region28: #{_lambda_.9} parent=0 // pred_region
    _
  $region29: #{_lambda_.9} parent=0 // pred_fallthru
    _
  %v27 = vld [vmem:[%s0] sm:$0xff]
  %v28 = vld [vmem:[%s0 + $0x8] sm:$0xff]
  %v29 = vld [vmem:[%s0 + $0x10] sm:$0xff]
  %v30 = vld [vmem:[%s0 + $0x18] sm:$0xff]
  %v31 = vld [vmem:[%s1] sm:$0x3f]
  %v32 = vld [vmem:[%s2] sm:$0x1]
  %v33 = vpack.c.bf16 %v28, %v27
  %v34 = vpack.c.bf16 %v30, %v29
  %v35 = vpack.c.bf16 %v31, %v31
  %v37 = vlaneseq
  %v38 = vshrl.u32 %v37, 7
  %v39 = vsub.s32 0, %v38
  %v40 = vrot.slane %v32, %v39
  %vm42 = vcmask 48128
  %v44 = vsel %vm42, %v33, 0
  %v47 = vsel %vm42, %v34, 0
  %vm49 = vcmask 1042432
  %v51 = vsel %vm49, %v35, 0
  %53 = vmatprep.subr.bf16.mxu0 0
  %54 = vmatpush1.bf16.msra.mxu0 0
  %55 = vmatprep.subr.bf16.mxu0 0
  %56 = vmatpush1.bf16.msra.mxu0 0
  %57 = vmatprep.subr.bf16.mxu0 0
  %58 = vmatpush1.bf16.msra.mxu0 0
  %59 = vmatprep.subr.bf16.mxu0 0
  %60 = vmatpush1.bf16.msra.mxu0 0
  %61 = vmatprep.subr.bf16.mxu0 0
  %62 = vmatpush1.bf16.msra.mxu0 0
  %63 = vmatprep.subr.bf16.mxu0 0
  %64 = vmatpush1.bf16.msra.mxu0 0
  %65 = vmatprep.subr.bf16.mxu0 0
  %66 = vmatpush1.bf16.msra.mxu0 0
  %67 = vmatprep.subr.bf16.mxu0 0
  %68 = vmatpush1.bf16.msra.mxu0 %v51
  %69 = vmatprep.subr.bf16.mxu0 0
  %70 = vmatpush2.bf16.msra.mxu0 0
  %71 = vmatprep.subr.bf16.mxu0 0
  %72 = vmatpush2.bf16.msra.mxu0 0
  %73 = vmatprep.subr.bf16.mxu0 0
  %74 = vmatpush2.bf16.msra.mxu0 0
  %75 = vmatprep.subr.bf16.mxu0 0
  %76 = vmatpush2.bf16.msra.mxu0 0
  %77 = vmatprep.subr.bf16.mxu0 0
  %78 = vmatpush2.bf16.msra.mxu0 0
  %79 = vmatprep.subr.bf16.mxu0 0
  %80 = vmatpush2.bf16.msra.mxu0 0
  %81 = vmatprep.subr.bf16.mxu0 0
  %82 = vmatpush2.bf16.msra.mxu0 0
  %83 = vmatprep.subr.bf16.mxu0 0
  %84 = vmatpush2.bf16.msra.mxu0 0
  %85 = vmatprep.mubr.bf16.mxu0 0
  %86 = vmatmul.mubr.bf16.gmra.mxu0 %v44
  %v87 = vpop.f32.mrf.mxu0
  %v88 = vadd.f32 %v40, %v87
  %v89 = vpop.f32.mrf.mxu0
  %v90 = vpop.f32.mrf.mxu0
  %v91 = vadd.f32 %v40, %v90
  %v92 = vpop.f32.mrf.mxu0
  %93 = vmatprep.mubr.bf16.mxu0 0
  %94 = vmatmul.mubr.bf16.gmra.mxu0 %v47
  %v95 = vpop.f32.mrf.mxu0
  %v96 = vadd.f32 %v40, %v95
  %v97 = vpop.f32.mrf.mxu0
  %v98 = vpop.f32.mrf.mxu0
  %v99 = vadd.f32 %v40, %v98
  %v100 = vpop.f32.mrf.mxu0
  %101 = vdwg.mxu0
  %v102 = vmax.f32 %v88, 0.0
  %v103 = vmax.f32 %v91, 0.0
  %v104 = vmax.f32 %v96, 0.0
  %v105 = vmax.f32 %v99, 0.0
  %v106 = vld [vmem:[%s3] sm:$0xff]
  %v107 = vld [vmem:[%s3 + $0x8] sm:$0xff]
  %v108 = vld [vmem:[%s3 + $0x10] sm:$0xff]
  %v109 = vld [vmem:[%s3 + $0x18] sm:$0xff]
  %v110 = vld [vmem:[%s4] sm:$0x1]
  %v111 = vpack.c.bf16 %v103, %v102
  %v112 = vpack.c.bf16 %v105, %v104
  %v113 = vpack.c.bf16 %v107, %v106
  %v114 = vpack.c.bf16 %v109, %v108
  %v116 = vlaneseq
  %v117 = vshrl.u32 %v116, 7
  %v118 = vsub.s32 0, %v117
  %v119 = vrot.slane %v110, %v118
  %vm121 = vcmask 261120
  %v123 = vsel %vm121, %v111, 0
  %v126 = vsel %vm121, %v112, 0
  %128 = vmatprep.subr.bf16.mxu0 0
  %129 = vmatpush1.bf16.msra.mxu0 0
  %130 = vmatprep.subr.bf16.mxu0 0
  %131 = vmatpush1.bf16.msra.mxu0 0
  %132 = vmatprep.subr.bf16.mxu0 0
  %133 = vmatpush1.bf16.msra.mxu0 0
  %134 = vmatprep.subr.bf16.mxu0 0
  %135 = vmatpush1.bf16.msra.mxu0 0
  %136 = vmatprep.subr.bf16.mxu0 0
  %137 = vmatpush1.bf16.msra.mxu0 0
  %138 = vmatprep.subr.bf16.mxu0 0
  %139 = vmatpush1.bf16.msra.mxu0 0
  %140 = vmatprep.subr.bf16.mxu0 0
  %141 = vmatpush1.bf16.msra.mxu0 %v114
  %142 = vmatprep.subr.bf16.mxu0 0
  %143 = vmatpush1.bf16.msra.mxu0 %v113
  %144 = vmatprep.subr.bf16.mxu0 0
  %145 = vmatpush2.bf16.msra.mxu0 0
  %146 = vmatprep.subr.bf16.mxu0 0
  %147 = vmatpush2.bf16.msra.mxu0 0
  %148 = vmatprep.subr.bf16.mxu0 0
  %149 = vmatpush2.bf16.msra.mxu0 0
  %150 = vmatprep.subr.bf16.mxu0 0
  %151 = vmatpush2.bf16.msra.mxu0 0
  %152 = vmatprep.subr.bf16.mxu0 0
  %153 = vmatpush2.bf16.msra.mxu0 0
  %154 = vmatprep.subr.bf16.mxu0 0
  %155 = vmatpush2.bf16.msra.mxu0 0
  %156 = vmatprep.subr.bf16.mxu0 0
  %157 = vmatpush2.bf16.msra.mxu0 0
  %158 = vmatprep.subr.bf16.mxu0 0
  %159 = vmatpush2.bf16.msra.mxu0 0
  %160 = vmatprep.mubr.bf16.mxu0 0
  %161 = vmatmul.mubr.bf16.gmra.mxu0 %v123
  %v162 = vpop.f32.mrf.mxu0
  %v163 = vadd.f32 %v119, %v162
  %v164 = vpop.f32.mrf.mxu0
  %v165 = vpop.f32.mrf.mxu0
  %v166 = vadd.f32 %v119, %v165
  %v167 = vpop.f32.mrf.mxu0
  %168 = vmatprep.mubr.bf16.mxu0 0
  %169 = vmatmul.mubr.bf16.gmra.mxu0 %v126
  %v170 = vpop.f32.mrf.mxu0
  %v171 = vadd.f32 %v119, %v170
  %v172 = vpop.f32.mrf.mxu0
  %v173 = vpop.f32.mrf.mxu0
  %v174 = vadd.f32 %v119, %v173
  %v175 = vpop.f32.mrf.mxu0
  %176 = vdwg.mxu0
  %v177 = vmax.f32 %v163, 0.0
  %v178 = vmax.f32 %v166, 0.0
  %v179 = vmax.f32 %v171, 0.0
  %v180 = vmax.f32 %v174, 0.0
  %v181 = vld [vmem:[%s5] sm:$0xff]
  %v182 = vld [vmem:[%s5 + $0x8] sm:$0xff]
  %v183 = vld [vmem:[%s5 + $0x10] sm:$0xff]
  %v184 = vld [vmem:[%s5 + $0x18] sm:$0xff]
  %v185 = vld [vmem:[%s6] sm:$0x1]
  %v186 = vpack.c.bf16 %v178, %v177
  %v187 = vpack.c.bf16 %v180, %v179
  %v188 = vpack.c.bf16 %v182, %v181
  %v189 = vpack.c.bf16 %v184, %v183
  %v191 = vlaneseq
  %v192 = vshrl.u32 %v191, 7
  %v193 = vsub.s32 0, %v192
  %v194 = vrot.slane %v185, %v193
  %v197 = vsel %vm121, %v186, 0
  %v200 = vsel %vm121, %v187, 0
  %202 = vmatprep.subr.bf16.mxu0 0
  %203 = vmatpush1.bf16.msra.mxu0 0
  %204 = vmatprep.subr.bf16.mxu0 0
  %205 = vmatpush1.bf16.msra.mxu0 0
  %206 = vmatprep.subr.bf16.mxu0 0
  %207 = vmatpush1.bf16.msra.mxu0 0
  %208 = vmatprep.subr.bf16.mxu0 0
  %209 = vmatpush1.bf16.msra.mxu0 0
  %210 = vmatprep.subr.bf16.mxu0 0
  %211 = vmatpush1.bf16.msra.mxu0 0
  %212 = vmatprep.subr.bf16.mxu0 0
  %213 = vmatpush1.bf16.msra.mxu0 0
  %214 = vmatprep.subr.bf16.mxu0 0
  %215 = vmatpush1.bf16.msra.mxu0 %v189
  %216 = vmatprep.subr.bf16.mxu0 0
  %217 = vmatpush1.bf16.msra.mxu0 %v188
  %218 = vmatprep.subr.bf16.mxu0 0
  %219 = vmatpush2.bf16.msra.mxu0 0
  %220 = vmatprep.subr.bf16.mxu0 0
  %221 = vmatpush2.bf16.msra.mxu0 0
  %222 = vmatprep.subr.bf16.mxu0 0
  %223 = vmatpush2.bf16.msra.mxu0 0
  %224 = vmatprep.subr.bf16.mxu0 0
  %225 = vmatpush2.bf16.msra.mxu0 0
  %226 = vmatprep.subr.bf16.mxu0 0
  %227 = vmatpush2.bf16.msra.mxu0 0
  %228 = vmatprep.subr.bf16.mxu0 0
  %229 = vmatpush2.bf16.msra.mxu0 0
  %230 = vmatprep.subr.bf16.mxu0 0
  %231 = vmatpush2.bf16.msra.mxu0 0
  %232 = vmatprep.subr.bf16.mxu0 0
  %233 = vmatpush2.bf16.msra.mxu0 0
  %234 = vmatprep.mubr.bf16.mxu0 0
  %235 = vmatmul.mubr.bf16.gmra.mxu0 %v197
  %v236 = vpop.f32.mrf.mxu0
  %v237 = vadd.f32 %v194, %v236
  %v238 = vpop.f32.mrf.mxu0
  %v239 = vpop.f32.mrf.mxu0
  %v240 = vadd.f32 %v194, %v239
  %v241 = vpop.f32.mrf.mxu0
  %242 = vmatprep.mubr.bf16.mxu0 0
  %243 = vmatmul.mubr.bf16.gmra.mxu0 %v200
  %v244 = vpop.f32.mrf.mxu0
  %v245 = vadd.f32 %v194, %v244
  %v246 = vpop.f32.mrf.mxu0
  %v247 = vpop.f32.mrf.mxu0
  %v248 = vadd.f32 %v194, %v247
  %v249 = vpop.f32.mrf.mxu0
  %250 = vdwg.mxu0
  %vm251 = vcmask 31744
  %252 = vst.msk [vmem:[%s7] sm:$0xff] %vm251, %v237
  %253 = vst.msk [vmem:[%s7 + $0x8] sm:$0xff] %vm251, %v240
  %254 = vst.msk [vmem:[%s7 + $0x10] sm:$0xff] %vm251, %v245
  %255 = vst.msk [vmem:[%s7 + $0x18] sm:$0xff] %vm251, %v248
  // Predicated region
  $region30: #{_lambda_.9} parent=0 // pred_check
    _
  $region31: #{_lambda_.9} parent=0 // pred_check_branch
    %257 = sbr.rel (0) target = $region33
  $region32: #{_lambda_.9} parent=0 // pred_region
    _
  $region33: #{_lambda_.9} parent=0 // pred_fallthru
    _
  // Predicated region
  $region34: #{_lambda_.9} parent=0 // pred_check
    _
  $region35: #{_lambda_.9} parent=0 // pred_check_branch
    %259 = sbr.rel (0) target = $region37
  $region36: #{_lambda_.9} parent=0 // pred_region
    _
  $region37: #{_lambda_.9} parent=0 // pred_fallthru
    _

// kernel: _lambda_.6
$region0: #{_lambda_.6}
  #allocation0 [shape = 'u32[]', space=smem, size = 0x4, offset = 0x4, fixed_abs, tag = 'smem constant byte address 0x4 - core index']
  #allocation1 [shape = 'u32[144,128]{1,0:T(1,128)}', space=vmem, size = 0x12000, scoped, tag = 'internal scratch']
  %s0 = inlined_call_operand.vmem [shape: f32[16,6], index: 0, kind: input, shape index: {}]
  %s1 = inlined_call_operand.vmem [shape: f32[6,256], index: 1, kind: input, shape index: {}]
  %s2 = inlined_call_operand.vmem [shape: f32[1,256], index: 2, kind: input, shape index: {}]
  %s3 = inlined_call_operand.vmem [shape: f32[256,256], index: 3, kind: input, shape index: {}]
  %s4 = inlined_call_operand.vmem [shape: f32[1,256], index: 4, kind: input, shape index: {}]
  %s5 = inlined_call_operand.vmem [shape: f32[256,256], index: 5, kind: input, shape index: {}]
  %s6 = inlined_call_operand.vmem [shape: f32[1,256], index: 6, kind: input, shape index: {}]
  %s7 = inlined_call_operand.vmem [shape: f32[256,7], index: 7, kind: input, shape index: {}]
  %s8 = inlined_call_operand.vmem [shape: f32[1,7], index: 8, kind: input, shape index: {}]
  %s9 = inlined_call_operand.vmem [shape: f32[16,7], index: 9, kind: output, shape index: {}]
  %s10 = sld [smem:[#allocation0]]
  $region46: #{_lambda_.6} parent=0
    _
  %s12 = ssub.s32 1, %s10
  %s13 = scalar_select 0, %s12, %s10
  // Predicated region
  $region2: #{_lambda_.6} parent=0 // pred_check
    _
  $region3: #{_lambda_.6} parent=0 // pred_check_branch
    %15 = sbr.rel (0) target = $region5
  $region4: #{_lambda_.6} parent=0 // pred_region
    _
  $region5: #{_lambda_.6} parent=0 // pred_fallthru
    _
  // Predicated region
  $region6: #{_lambda_.6} parent=0 // pred_check
    _
  $region7: #{_lambda_.6} parent=0 // pred_check_branch
    %17 = sbr.rel (0) target = $region9
  $region8: #{_lambda_.6} parent=0 // pred_region
    _
  $region9: #{_lambda_.6} parent=0 // pred_fallthru
    _
  // Predicated region
  $region10: #{_lambda_.6} parent=0 // pred_check
    _
  $region11: #{_lambda_.6} parent=0 // pred_check_branch
    %19 = sbr.rel (0) target = $region13
  $region12: #{_lambda_.6} parent=0 // pred_region
    _
  $region13: #{_lambda_.6} parent=0 // pred_fallthru
    _
  // Predicated region
  $region14: #{_lambda_.6} parent=0 // pred_check
    _
  $region15: #{_lambda_.6} parent=0 // pred_check_branch
    %21 = sbr.rel (0) target = $region17
  $region16: #{_lambda_.6} parent=0 // pred_region
    _
  $region17: #{_lambda_.6} parent=0 // pred_fallthru
    _
  // Predicated region
  $region18: #{_lambda_.6} parent=0 // pred_check
    _
  $region19: #{_lambda_.6} parent=0 // pred_check_branch
    %23 = sbr.rel (0) target = $region21
  $region20: #{_lambda_.6} parent=0 // pred_region
    _
  $region21: #{_lambda_.6} parent=0 // pred_fallthru
    _
  // Predicated region
  $region22: #{_lambda_.6} parent=0 // pred_check
    _
  $region23: #{_lambda_.6} parent=0 // pred_check_branch
    %25 = sbr.rel (0) target = $region25
  $region24: #{_lambda_.6} parent=0 // pred_region
    _
  $region25: #{_lambda_.6} parent=0 // pred_fallthru
    _
  // Predicated region
  $region26: #{_lambda_.6} parent=0 // pred_check
    _
  $region27: #{_lambda_.6} parent=0 // pred_check_branch
    %27 = sbr.rel (0) target = $region29
  $region28: #{_lambda_.6} parent=0 // pred_region
    _
  $region29: #{_lambda_.6} parent=0 // pred_fallthru
    _
  // Predicated region
  $region30: #{_lambda_.6} parent=0 // pred_check
    _
  $region31: #{_lambda_.6} parent=0 // pred_check_branch
    %29 = sbr.rel (0) target = $region33
  $region32: #{_lambda_.6} parent=0 // pred_region
    _
  $region33: #{_lambda_.6} parent=0 // pred_fallthru
    _
  // Predicated region
  $region34: #{_lambda_.6} parent=0 // pred_check
    _
  $region35: #{_lambda_.6} parent=0 // pred_check_branch
    %31 = sbr.rel (0) target = $region37
  $region36: #{_lambda_.6} parent=0 // pred_region
    _
  $region37: #{_lambda_.6} parent=0 // pred_fallthru
    _
  %v33 = vld [vmem:[%s0] sm:$0xff]
  %v34 = vld [vmem:[%s0 + $0x8] sm:$0xff]
  %v35 = vld [vmem:[%s1] sm:$0x3f]
  %v36 = vld [vmem:[%s1 + $0x8] sm:$0x3f]
  %v37 = vld [vmem:[%s2] sm:$0x3]
  %v38 = vpack.c.bf16 %v34, %v33
  %v39 = vpack.c.bf16 %v35, %v35
  %v40 = vpack.c.bf16 %v36, %v36
  %v42 = vlaneseq
  %v43 = vshrl.u32 %v42, 7
  %v44 = vsub.s32 0, %v43
  %v45 = vrot.slane %v37, %v44
  %v46 = vlaneseq
  %v47 = vshrl.u32 %v46, 7
  %v48 = vsub.s32 1, %v47
  %v49 = vrot.slane %v37, %v48
  %vm52 = vcmask 48128
  %v54 = vsel %vm52, %v38, 0
  %vm56 = vcmask 1042432
  %v58 = vsel %vm56, %v39, 0
  %v61 = vsel %vm56, %v40, 0
  %63 = vmatprep.subr.bf16.mxu0 0
  %64 = vmatpush1.bf16.msra.mxu0 0
  %65 = vmatprep.subr.bf16.mxu0 0
  %66 = vmatpush1.bf16.msra.mxu0 0
  %67 = vmatprep.subr.bf16.mxu0 0
  %68 = vmatpush1.bf16.msra.mxu0 0
  %69 = vmatprep.subr.bf16.mxu0 0
  %70 = vmatpush1.bf16.msra.mxu0 0
  %71 = vmatprep.subr.bf16.mxu0 0
  %72 = vmatpush1.bf16.msra.mxu0 0
  %73 = vmatprep.subr.bf16.mxu0 0
  %74 = vmatpush1.bf16.msra.mxu0 0
  %75 = vmatprep.subr.bf16.mxu0 0
  %76 = vmatpush1.bf16.msra.mxu0 0
  %77 = vmatprep.subr.bf16.mxu0 %v61
  %78 = vmatpush1.bf16.msra.mxu0 %v58
  %79 = vmatprep.subr.bf16.mxu0 0
  %80 = vmatpush2.bf16.msra.mxu0 0
  %81 = vmatprep.subr.bf16.mxu0 0
  %82 = vmatpush2.bf16.msra.mxu0 0
  %83 = vmatprep.subr.bf16.mxu0 0
  %84 = vmatpush2.bf16.msra.mxu0 0
  %85 = vmatprep.subr.bf16.mxu0 0
  %86 = vmatpush2.bf16.msra.mxu0 0
  %87 = vmatprep.subr.bf16.mxu0 0
  %88 = vmatpush2.bf16.msra.mxu0 0
  %89 = vmatprep.subr.bf16.mxu0 0
  %90 = vmatpush2.bf16.msra.mxu0 0
  %91 = vmatprep.subr.bf16.mxu0 0
  %92 = vmatpush2.bf16.msra.mxu0 0
  %93 = vmatprep.subr.bf16.mxu0 0
  %94 = vmatpush2.bf16.msra.mxu0 0
  %95 = vmatprep.mubr.bf16.mxu0 0
  %96 = vmatmul.mubr.bf16.gmra.mxu0 %v54
  %v97 = vpop.f32.mrf.mxu0
  %v98 = vadd.f32 %v45, %v97
  %v99 = vpop.f32.mrf.mxu0
  %v100 = vadd.f32 %v49, %v99
  %v101 = vpop.f32.mrf.mxu0
  %v102 = vadd.f32 %v45, %v101
  %v103 = vpop.f32.mrf.mxu0
  %v104 = vadd.f32 %v49, %v103
  %105 = vdwg.mxu0
  %v106 = vmax.f32 %v98, 0.0
  %v107 = vmax.f32 %v100, 0.0
  %v108 = vmax.f32 %v102, 0.0
  %v109 = vmax.f32 %v104, 0.0
  %v110 = vld [vmem:[%s3] sm:$0xff]
  %v111 = vld [vmem:[%s3 + $0x8] sm:$0xff]
  %v112 = vld [vmem:[%s3 + $0x10] sm:$0xff]
  %v113 = vld [vmem:[%s3 + $0x18] sm:$0xff]
  %v114 = vld [vmem:[%s3 + $0x20] sm:$0xff]
  %v115 = vld [vmem:[%s3 + $0x28] sm:$0xff]
  %v116 = vld [vmem:[%s3 + $0x30] sm:$0xff]
  %v117 = vld [vmem:[%s3 + $0x38] sm:$0xff]
  %v118 = vld [vmem:[%s3 + $0x40] sm:$0xff]
  %v119 = vld [vmem:[%s3 + $0x48] sm:$0xff]
  %v120 = vld [vmem:[%s3 + $0x50] sm:$0xff]
  %v121 = vld [vmem:[%s3 + $0x58] sm:$0xff]
  %v122 = vld [vmem:[%s3 + $0x60] sm:$0xff]
  %v123 = vld [vmem:[%s3 + $0x68] sm:$0xff]
  %v124 = vld [vmem:[%s3 + $0x70] sm:$0xff]
  %v125 = vld [vmem:[%s3 + $0x78] sm:$0xff]
  %v126 = vld [vmem:[%s3 + $0x80] sm:$0xff]
  %v127 = vld [vmem:[%s3 + $0x88] sm:$0xff]
  %v128 = vld [vmem:[%s3 + $0x90] sm:$0xff]
  %v129 = vld [vmem:[%s3 + $0x98] sm:$0xff]
  %v130 = vld [vmem:[%s3 + $0xa0] sm:$0xff]
  %v131 = vld [vmem:[%s3 + $0xa8] sm:$0xff]
  %v132 = vld [vmem:[%s3 + $0xb0] sm:$0xff]
  %v133 = vld [vmem:[%s3 + $0xb8] sm:$0xff]
  %v134 = vld [vmem:[%s3 + $0xc0] sm:$0xff]
  %v135 = vld [vmem:[%s3 + $0xc8] sm:$0xff]
  %v136 = vld [vmem:[%s3 + $0xd0] sm:$0xff]
  %v137 = vld [vmem:[%s3 + $0xd8] sm:$0xff]
  %v138 = vld [vmem:[%s3 + $0xe0] sm:$0xff]
  %v139 = vld [vmem:[%s3 + $0xe8] sm:$0xff]
  %v140 = vld [vmem:[%s3 + $0xf0] sm:$0xff]
  %v141 = vld [vmem:[%s3 + $0xf8] sm:$0xff]
  %v142 = vld [vmem:[%s3 + $0x100] sm:$0xff]
  %v143 = vld [vmem:[%s3 + $0x108] sm:$0xff]
  %v144 = vld [vmem:[%s3 + $0x110] sm:$0xff]
  %v145 = vld [vmem:[%s3 + $0x118] sm:$0xff]
  %v146 = vld [vmem:[%s3 + $0x120] sm:$0xff]
  %v147 = vld [vmem:[%s3 + $0x128] sm:$0xff]
  %v148 = vld [vmem:[%s3 + $0x130] sm:$0xff]
  %v149 = vld [vmem:[%s3 + $0x138] sm:$0xff]
  %v150 = vld [vmem:[%s3 + $0x140] sm:$0xff]
  %v151 = vld [vmem:[%s3 + $0x148] sm:$0xff]
  %v152 = vld [vmem:[%s3 + $0x150] sm:$0xff]
  %v153 = vld [vmem:[%s3 + $0x158] sm:$0xff]
  %v154 = vld [vmem:[%s3 + $0x160] sm:$0xff]
  %v155 = vld [vmem:[%s3 + $0x168] sm:$0xff]
  %v156 = vld [vmem:[%s3 + $0x170] sm:$0xff]
  %v157 = vld [vmem:[%s3 + $0x178] sm:$0xff]
  %v158 = vld [vmem:[%s3 + $0x180] sm:$0xff]
  %v159 = vld [vmem:[%s3 + $0x188] sm:$0xff]
  %v160 = vld [vmem:[%s3 + $0x190] sm:$0xff]
  %v161 = vld [vmem:[%s3 + $0x198] sm:$0xff]
  %v162 = vld [vmem:[%s3 + $0x1a0] sm:$0xff]
  %v163 = vld [vmem:[%s3 + $0x1a8] sm:$0xff]
  %v164 = vld [vmem:[%s3 + $0x1b0] sm:$0xff]
  %v165 = vld [vmem:[%s3 + $0x1b8] sm:$0xff]
  %v166 = vld [vmem:[%s3 + $0x1c0] sm:$0xff]
  %v167 = vld [vmem:[%s3 + $0x1c8] sm:$0xff]
  %v168 = vld [vmem:[%s3 + $0x1d0] sm:$0xff]
  %v169 = vld [vmem:[%s3 + $0x1d8] sm:$0xff]
  %v170 = vld [vmem:[%s3 + $0x1e0] sm:$0xff]
  %v171 = vld [vmem:[%s3 + $0x1e8] sm:$0xff]
  %v172 = vld [vmem:[%s3 + $0x1f0] sm:$0xff]
  %v173 = vld [vmem:[%s3 + $0x1f8] sm:$0xff]
  %v174 = vld [vmem:[%s4] sm:$0x3]
  %v175 = vpack.c.bf16 %v108, %v106
  %v176 = vpack.c.bf16 %v109, %v107
  %v177 = vpack.c.bf16 %v112, %v110
  %v178 = vpack.c.bf16 %v113, %v111
  %v179 = vpack.c.bf16 %v116, %v114
  %v180 = vpack.c.bf16 %v117, %v115
  %v181 = vpack.c.bf16 %v120, %v118
  %v182 = vpack.c.bf16 %v121, %v119
  %v183 = vpack.c.bf16 %v124, %v122
  %v184 = vpack.c.bf16 %v125, %v123
  %v185 = vpack.c.bf16 %v128, %v126
  %v186 = vpack.c.bf16 %v129, %v127
  %v187 = vpack.c.bf16 %v132, %v130
  %v188 = vpack.c.bf16 %v133, %v131
  %v189 = vpack.c.bf16 %v136, %v134
  %v190 = vpack.c.bf16 %v137, %v135
  %v191 = vpack.c.bf16 %v140, %v138
  %v192 = vpack.c.bf16 %v141, %v139
  %v193 = vpack.c.bf16 %v144, %v142
  %v194 = vpack.c.bf16 %v145, %v143
  %v195 = vpack.c.bf16 %v148, %v146
  %v196 = vpack.c.bf16 %v149, %v147
  %v197 = vpack.c.bf16 %v152, %v150
  %v198 = vpack.c.bf16 %v153, %v151
  %v199 = vpack.c.bf16 %v156, %v154
  %v200 = vpack.c.bf16 %v157, %v155
  %v201 = vpack.c.bf16 %v160, %v158
  %v202 = vpack.c.bf16 %v161, %v159
  %v203 = vpack.c.bf16 %v164, %v162
  %v204 = vpack.c.bf16 %v165, %v163
  %v205 = vpack.c.bf16 %v168, %v166
  %v206 = vpack.c.bf16 %v169, %v167
  %v207 = vpack.c.bf16 %v172, %v170
  %v208 = vpack.c.bf16 %v173, %v171
  %v210 = vlaneseq
  %v211 = vshrl.u32 %v210, 7
  %v212 = vsub.s32 0, %v211
  %v213 = vrot.slane %v174, %v212
  %v214 = vlaneseq
  %v215 = vshrl.u32 %v214, 7
  %v216 = vsub.s32 1, %v215
  %v217 = vrot.slane %v174, %v216
  %220 = vmatprep.subr.bf16.mxu0 %v192
  %221 = vmatpush1.bf16.msra.mxu0 %v191
  %222 = vmatprep.subr.bf16.mxu0 %v190
  %223 = vmatpush1.bf16.msra.mxu0 %v189
  %224 = vmatprep.subr.bf16.mxu0 %v188
  %225 = vmatpush1.bf16.msra.mxu0 %v187
  %226 = vmatprep.subr.bf16.mxu0 %v186
  %227 = vmatpush1.bf16.msra.mxu0 %v185
  %228 = vmatprep.subr.bf16.mxu0 %v184
  %229 = vmatpush1.bf16.msra.mxu0 %v183
  %230 = vmatprep.subr.bf16.mxu0 %v182
  %231 = vmatpush1.bf16.msra.mxu0 %v181
  %232 = vmatprep.subr.bf16.mxu0 %v180
  %233 = vmatpush1.bf16.msra.mxu0 %v179
  %234 = vmatprep.subr.bf16.mxu0 %v178
  %235 = vmatpush1.bf16.msra.mxu0 %v177
  %236 = vmatprep.subr.bf16.mxu0 %v208
  %237 = vmatpush2.bf16.msra.mxu0 %v207
  %238 = vmatprep.subr.bf16.mxu0 %v206
  %239 = vmatpush2.bf16.msra.mxu0 %v205
  %240 = vmatprep.subr.bf16.mxu0 %v204
  %241 = vmatpush2.bf16.msra.mxu0 %v203
  %242 = vmatprep.subr.bf16.mxu0 %v202
  %243 = vmatpush2.bf16.msra.mxu0 %v201
  %244 = vmatprep.subr.bf16.mxu0 %v200
  %245 = vmatpush2.bf16.msra.mxu0 %v199
  %246 = vmatprep.subr.bf16.mxu0 %v198
  %247 = vmatpush2.bf16.msra.mxu0 %v197
  %248 = vmatprep.subr.bf16.mxu0 %v196
  %249 = vmatpush2.bf16.msra.mxu0 %v195
  %250 = vmatprep.subr.bf16.mxu0 %v194
  %251 = vmatpush2.bf16.msra.mxu0 %v193
  %252 = vmatprep.mubr.bf16.mxu0 %v176
  %253 = vmatmul.mubr.bf16.gmra.mxu0 %v175
  %v254 = vpop.f32.mrf.mxu0
  %v255 = vadd.f32 %v213, %v254
  %v256 = vpop.f32.mrf.mxu0
  %v257 = vadd.f32 %v217, %v256
  %v258 = vpop.f32.mrf.mxu0
  %v259 = vadd.f32 %v213, %v258
  %v260 = vpop.f32.mrf.mxu0
  %v261 = vadd.f32 %v217, %v260
  %262 = vdwg.mxu0
  %v263 = vmax.f32 %v255, 0.0
  %v264 = vmax.f32 %v257, 0.0
  %v265 = vmax.f32 %v259, 0.0
  %v266 = vmax.f32 %v261, 0.0
  %v267 = vld [vmem:[%s5] sm:$0xff]
  %v268 = vld [vmem:[%s5 + $0x8] sm:$0xff]
  %v269 = vld [vmem:[%s5 + $0x10] sm:$0xff]
  %v270 = vld [vmem:[%s5 + $0x18] sm:$0xff]
  %v271 = vld [vmem:[%s5 + $0x20] sm:$0xff]
  %v272 = vld [vmem:[%s5 + $0x28] sm:$0xff]
  %v273 = vld [vmem:[%s5 + $0x30] sm:$0xff]
  %v274 = vld [vmem:[%s5 + $0x38] sm:$0xff]
  %v275 = vld [vmem:[%s5 + $0x40] sm:$0xff]
  %v276 = vld [vmem:[%s5 + $0x48] sm:$0xff]
  %v277 = vld [vmem:[%s5 + $0x50] sm:$0xff]
  %v278 = vld [vmem:[%s5 + $0x58] sm:$0xff]
  %v279 = vld [vmem:[%s5 + $0x60] sm:$0xff]
  %v280 = vld [vmem:[%s5 + $0x68] sm:$0xff]
  %v281 = vld [vmem:[%s5 + $0x70] sm:$0xff]
  %v282 = vld [vmem:[%s5 + $0x78] sm:$0xff]
  %v283 = vld [vmem:[%s5 + $0x80] sm:$0xff]
  %v284 = vld [vmem:[%s5 + $0x88] sm:$0xff]
  %v285 = vld [vmem:[%s5 + $0x90] sm:$0xff]
  %v286 = vld [vmem:[%s5 + $0x98] sm:$0xff]
  %v287 = vld [vmem:[%s5 + $0xa0] sm:$0xff]
  %v288 = vld [vmem:[%s5 + $0xa8] sm:$0xff]
  %v289 = vld [vmem:[%s5 + $0xb0] sm:$0xff]
  %v290 = vld [vmem:[%s5 + $0xb8] sm:$0xff]
  %v291 = vld [vmem:[%s5 + $0xc0] sm:$0xff]
  %v292 = vld [vmem:[%s5 + $0xc8] sm:$0xff]
  %v293 = vld [vmem:[%s5 + $0xd0] sm:$0xff]
  %v294 = vld [vmem:[%s5 + $0xd8] sm:$0xff]
  %v295 = vld [vmem:[%s5 + $0xe0] sm:$0xff]
  %v296 = vld [vmem:[%s5 + $0xe8] sm:$0xff]
  %v297 = vld [vmem:[%s5 + $0xf0] sm:$0xff]
  %v298 = vld [vmem:[%s5 + $0xf8] sm:$0xff]
  %v299 = vld [vmem:[%s5 + $0x100] sm:$0xff]
  %v300 = vld [vmem:[%s5 + $0x108] sm:$0xff]
  %v301 = vld [vmem:[%s5 + $0x110] sm:$0xff]
  %v302 = vld [vmem:[%s5 + $0x118] sm:$0xff]
  %v303 = vld [vmem:[%s5 + $0x120] sm:$0xff]
  %v304 = vld [vmem:[%s5 + $0x128] sm:$0xff]
  %v305 = vld [vmem:[%s5 + $0x130] sm:$0xff]
  %v306 = vld [vmem:[%s5 + $0x138] sm:$0xff]
  %v307 = vld [vmem:[%s5 + $0x140] sm:$0xff]
  %v308 = vld [vmem:[%s5 + $0x148] sm:$0xff]
  %v309 = vld [vmem:[%s5 + $0x150] sm:$0xff]
  %v310 = vld [vmem:[%s5 + $0x158] sm:$0xff]
  %v311 = vld [vmem:[%s5 + $0x160] sm:$0xff]
  %v312 = vld [vmem:[%s5 + $0x168] sm:$0xff]
  %v313 = vld [vmem:[%s5 + $0x170] sm:$0xff]
  %v314 = vld [vmem:[%s5 + $0x178] sm:$0xff]
  %v315 = vld [vmem:[%s5 + $0x180] sm:$0xff]
  %v316 = vld [vmem:[%s5 + $0x188] sm:$0xff]
  %v317 = vld [vmem:[%s5 + $0x190] sm:$0xff]
  %v318 = vld [vmem:[%s5 + $0x198] sm:$0xff]
  %v319 = vld [vmem:[%s5 + $0x1a0] sm:$0xff]
  %v320 = vld [vmem:[%s5 + $0x1a8] sm:$0xff]
  %v321 = vld [vmem:[%s5 + $0x1b0] sm:$0xff]
  %v322 = vld [vmem:[%s5 + $0x1b8] sm:$0xff]
  %v323 = vld [vmem:[%s5 + $0x1c0] sm:$0xff]
  %v324 = vld [vmem:[%s5 + $0x1c8] sm:$0xff]
  %v325 = vld [vmem:[%s5 + $0x1d0] sm:$0xff]
  %v326 = vld [vmem:[%s5 + $0x1d8] sm:$0xff]
  %v327 = vld [vmem:[%s5 + $0x1e0] sm:$0xff]
  %v328 = vld [vmem:[%s5 + $0x1e8] sm:$0xff]
  %v329 = vld [vmem:[%s5 + $0x1f0] sm:$0xff]
  %v330 = vld [vmem:[%s5 + $0x1f8] sm:$0xff]
  %v331 = vld [vmem:[%s6] sm:$0x3]
  %v332 = vpack.c.bf16 %v265, %v263
  %v333 = vpack.c.bf16 %v266, %v264
  %v334 = vpack.c.bf16 %v269, %v267
  %v335 = vpack.c.bf16 %v270, %v268
  %v336 = vpack.c.bf16 %v273, %v271
  %v337 = vpack.c.bf16 %v274, %v272
  %v338 = vpack.c.bf16 %v277, %v275
  %v339 = vpack.c.bf16 %v278, %v276
  %v340 = vpack.c.bf16 %v281, %v279
  %v341 = vpack.c.bf16 %v282, %v280
  %v342 = vpack.c.bf16 %v285, %v283
  %v343 = vpack.c.bf16 %v286, %v284
  %v344 = vpack.c.bf16 %v289, %v287
  %v345 = vpack.c.bf16 %v290, %v288
  %v346 = vpack.c.bf16 %v293, %v291
  %v347 = vpack.c.bf16 %v294, %v292
  %v348 = vpack.c.bf16 %v297, %v295
  %v349 = vpack.c.bf16 %v298, %v296
  %v350 = vpack.c.bf16 %v301, %v299
  %v351 = vpack.c.bf16 %v302, %v300
  %v352 = vpack.c.bf16 %v305, %v303
  %v353 = vpack.c.bf16 %v306, %v304
  %v354 = vpack.c.bf16 %v309, %v307
  %v355 = vpack.c.bf16 %v310, %v308
  %v356 = vpack.c.bf16 %v313, %v311
  %v357 = vpack.c.bf16 %v314, %v312
  %v358 = vpack.c.bf16 %v317, %v315
  %v359 = vpack.c.bf16 %v318, %v316
  %v360 = vpack.c.bf16 %v321, %v319
  %v361 = vpack.c.bf16 %v322, %v320
  %v362 = vpack.c.bf16 %v325, %v323
  %v363 = vpack.c.bf16 %v326, %v324
  %v364 = vpack.c.bf16 %v329, %v327
  %v365 = vpack.c.bf16 %v330, %v328
  %v367 = vlaneseq
  %v368 = vshrl.u32 %v367, 7
  %v369 = vsub.s32 0, %v368
  %v370 = vrot.slane %v331, %v369
  %v371 = vlaneseq
  %v372 = vshrl.u32 %v371, 7
  %v373 = vsub.s32 1, %v372
  %v374 = vrot.slane %v331, %v373
  %377 = vmatprep.subr.bf16.mxu0 %v349
  %378 = vmatpush1.bf16.msra.mxu0 %v348
  %379 = vmatprep.subr.bf16.mxu0 %v347
  %380 = vmatpush1.bf16.msra.mxu0 %v346
  %381 = vmatprep.subr.bf16.mxu0 %v345
  %382 = vmatpush1.bf16.msra.mxu0 %v344
  %383 = vmatprep.subr.bf16.mxu0 %v343
  %384 = vmatpush1.bf16.msra.mxu0 %v342
  %385 = vmatprep.subr.bf16.mxu0 %v341
  %386 = vmatpush1.bf16.msra.mxu0 %v340
  %387 = vmatprep.subr.bf16.mxu0 %v339
  %388 = vmatpush1.bf16.msra.mxu0 %v338
  %389 = vmatprep.subr.bf16.mxu0 %v337
  %390 = vmatpush1.bf16.msra.mxu0 %v336
  %391 = vmatprep.subr.bf16.mxu0 %v335
  %392 = vmatpush1.bf16.msra.mxu0 %v334
  %393 = vmatprep.subr.bf16.mxu0 %v365
  %394 = vmatpush2.bf16.msra.mxu0 %v364
  %395 = vmatprep.subr.bf16.mxu0 %v363
  %396 = vmatpush2.bf16.msra.mxu0 %v362
  %397 = vmatprep.subr.bf16.mxu0 %v361
  %398 = vmatpush2.bf16.msra.mxu0 %v360
  %399 = vmatprep.subr.bf16.mxu0 %v359
  %400 = vmatpush2.bf16.msra.mxu0 %v358
  %401 = vmatprep.subr.bf16.mxu0 %v357
  %402 = vmatpush2.bf16.msra.mxu0 %v356
  %403 = vmatprep.subr.bf16.mxu0 %v355
  %404 = vmatpush2.bf16.msra.mxu0 %v354
  %405 = vmatprep.subr.bf16.mxu0 %v353
  %406 = vmatpush2.bf16.msra.mxu0 %v352
  %407 = vmatprep.subr.bf16.mxu0 %v351
  %408 = vmatpush2.bf16.msra.mxu0 %v350
  %409 = vmatprep.mubr.bf16.mxu0 %v333
  %410 = vmatmul.mubr.bf16.gmra.mxu0 %v332
  %v411 = vpop.f32.mrf.mxu0
  %v412 = vadd.f32 %v370, %v411
  %v413 = vpop.f32.mrf.mxu0
  %v414 = vadd.f32 %v374, %v413
  %v415 = vpop.f32.mrf.mxu0
  %v416 = vadd.f32 %v370, %v415
  %v417 = vpop.f32.mrf.mxu0
  %v418 = vadd.f32 %v374, %v417
  %419 = vdwg.mxu0
  %v420 = vmax.f32 %v412, 0.0
  %v421 = vmax.f32 %v414, 0.0
  %v422 = vmax.f32 %v416, 0.0
  %v423 = vmax.f32 %v418, 0.0
  %v424 = vld [vmem:[%s7] sm:$0xff]
  %v425 = vld [vmem:[%s7 + $0x8] sm:$0xff]
  %v426 = vld [vmem:[%s7 + $0x10] sm:$0xff]
  %v427 = vld [vmem:[%s7 + $0x18] sm:$0xff]
  %v428 = vld [vmem:[%s7 + $0x20] sm:$0xff]
  %v429 = vld [vmem:[%s7 + $0x28] sm:$0xff]
  %v430 = vld [vmem:[%s7 + $0x30] sm:$0xff]
  %v431 = vld [vmem:[%s7 + $0x38] sm:$0xff]
  %v432 = vld [vmem:[%s7 + $0x40] sm:$0xff]
  %v433 = vld [vmem:[%s7 + $0x48] sm:$0xff]
  %v434 = vld [vmem:[%s7 + $0x50] sm:$0xff]
  %v435 = vld [vmem:[%s7 + $0x58] sm:$0xff]
  %v436 = vld [vmem:[%s7 + $0x60] sm:$0xff]
  %v437 = vld [vmem:[%s7 + $0x68] sm:$0xff]
  %v438 = vld [vmem:[%s7 + $0x70] sm:$0xff]
  %v439 = vld [vmem:[%s7 + $0x78] sm:$0xff]
  %v440 = vld [vmem:[%s7 + $0x80] sm:$0xff]
  %v441 = vld [vmem:[%s7 + $0x88] sm:$0xff]
  %v442 = vld [vmem:[%s7 + $0x90] sm:$0xff]
  %v443 = vld [vmem:[%s7 + $0x98] sm:$0xff]
  %v444 = vld [vmem:[%s7 + $0xa0] sm:$0xff]
  %v445 = vld [vmem:[%s7 + $0xa8] sm:$0xff]
  %v446 = vld [vmem:[%s7 + $0xb0] sm:$0xff]
  %v447 = vld [vmem:[%s7 + $0xb8] sm:$0xff]
  %v448 = vld [vmem:[%s7 + $0xc0] sm:$0xff]
  %v449 = vld [vmem:[%s7 + $0xc8] sm:$0xff]
  %v450 = vld [vmem:[%s7 + $0xd0] sm:$0xff]
  %v451 = vld [vmem:[%s7 + $0xd8] sm:$0xff]
  %v452 = vld [vmem:[%s7 + $0xe0] sm:$0xff]
  %v453 = vld [vmem:[%s7 + $0xe8] sm:$0xff]
  %v454 = vld [vmem:[%s7 + $0xf0] sm:$0xff]
  %v455 = vld [vmem:[%s7 + $0xf8] sm:$0xff]
  %v456 = vld [vmem:[%s8] sm:$0x1]
  %v457 = vpack.c.bf16 %v422, %v420
  %v458 = vpack.c.bf16 %v423, %v421
  %v459 = vpack.c.bf16 %v425, %v424
  %v460 = vpack.c.bf16 %v427, %v426
  %v461 = vpack.c.bf16 %v429, %v428
  %v462 = vpack.c.bf16 %v431, %v430
  %v463 = vpack.c.bf16 %v433, %v432
  %v464 = vpack.c.bf16 %v435, %v434
  %v465 = vpack.c.bf16 %v437, %v436
  %v466 = vpack.c.bf16 %v439, %v438
  %v467 = vpack.c.bf16 %v441, %v440
  %v468 = vpack.c.bf16 %v443, %v442
  %v469 = vpack.c.bf16 %v445, %v444
  %v470 = vpack.c.bf16 %v447, %v446
  %v471 = vpack.c.bf16 %v449, %v448
  %v472 = vpack.c.bf16 %v451, %v450
  %v473 = vpack.c.bf16 %v453, %v452
  %v474 = vpack.c.bf16 %v455, %v454
  %v476 = vlaneseq
  %v477 = vshrl.u32 %v476, 7
  %v478 = vsub.s32 0, %v477
  %v479 = vrot.slane %v456, %v478
  %481 = vmatprep.subr.bf16.mxu0 0
  %482 = vmatpush1.bf16.msra.mxu0 %v466
  %483 = vmatprep.subr.bf16.mxu0 0
  %484 = vmatpush1.bf16.msra.mxu0 %v465
  %485 = vmatprep.subr.bf16.mxu0 0
  %486 = vmatpush1.bf16.msra.mxu0 %v464
  %487 = vmatprep.subr.bf16.mxu0 0
  %488 = vmatpush1.bf16.msra.mxu0 %v463
  %489 = vmatprep.subr.bf16.mxu0 0
  %490 = vmatpush1.bf16.msra.mxu0 %v462
  %491 = vmatprep.subr.bf16.mxu0 0
  %492 = vmatpush1.bf16.msra.mxu0 %v461
  %493 = vmatprep.subr.bf16.mxu0 0
  %494 = vmatpush1.bf16.msra.mxu0 %v460
  %495 = vmatprep.subr.bf16.mxu0 0
  %496 = vmatpush1.bf16.msra.mxu0 %v459
  %497 = vmatprep.subr.bf16.mxu0 0
  %498 = vmatpush2.bf16.msra.mxu0 %v474
  %499 = vmatprep.subr.bf16.mxu0 0
  %500 = vmatpush2.bf16.msra.mxu0 %v473
  %501 = vmatprep.subr.bf16.mxu0 0
  %502 = vmatpush2.bf16.msra.mxu0 %v472
  %503 = vmatprep.subr.bf16.mxu0 0
  %504 = vmatpush2.bf16.msra.mxu0 %v471
  %505 = vmatprep.subr.bf16.mxu0 0
  %506 = vmatpush2.bf16.msra.mxu0 %v470
  %507 = vmatprep.subr.bf16.mxu0 0
  %508 = vmatpush2.bf16.msra.mxu0 %v469
  %509 = vmatprep.subr.bf16.mxu0 0
  %510 = vmatpush2.bf16.msra.mxu0 %v468
  %511 = vmatprep.subr.bf16.mxu0 0
  %512 = vmatpush2.bf16.msra.mxu0 %v467
  %513 = vmatprep.mubr.bf16.mxu0 %v458
  %514 = vmatmul.mubr.bf16.gmra.mxu0 %v457
  %v515 = vpop.f32.mrf.mxu0
  %v516 = vadd.f32 %v479, %v515
  %v517 = vpop.f32.mrf.mxu0
  %v518 = vpop.f32.mrf.mxu0
  %v519 = vadd.f32 %v479, %v518
  %v520 = vpop.f32.mrf.mxu0
  %521 = vdwg.mxu0
  %vm522 = vcmask 56320
  %523 = vst.msk [vmem:[%s9] sm:$0xff] %vm522, %v516
  %524 = vst.msk [vmem:[%s9 + $0x8] sm:$0xff] %vm522, %v519
  // Predicated region
  $region38: #{_lambda_.6} parent=0 // pred_check
    _
  $region39: #{_lambda_.6} parent=0 // pred_check_branch
    %526 = sbr.rel (0) target = $region41
  $region40: #{_lambda_.6} parent=0 // pred_region
    _
  $region41: #{_lambda_.6} parent=0 // pred_fallthru
    _
  // Predicated region
  $region42: #{_lambda_.6} parent=0 // pred_check
    _
  $region43: #{_lambda_.6} parent=0 // pred_check_branch
    %528 = sbr.rel (0) target = $region45
  $region44: #{_lambda_.6} parent=0 // pred_region
    _
  $region45: #{_lambda_.6} parent=0 // pred_fallthru
    _

</llo_original>
